<compile_context>
chip_gen: v7x
topology: tpu7x:2x2x1
jax: 0.10.0
libtpu: 0.0.40
codegen_flags: <defaults>
</compile_context>

<pallas_src>
import functools

import jax
import jax.numpy as jnp
from jax import lax
from jax.experimental import pallas as pl
from jax.experimental.pallas import tpu as pltpu


def _round_up(v, m):
    return ((v + m - 1) // m) * m


def _vmem_budget_and_limit():
    """Generation-aware VMEM numbers (v5e/v6e: 128 MiB, v7x: 64 MiB per TC)."""
    cap = 64 * 1024 * 1024  # conservative (v7x-sized) default if the query fails
    try:
        info = pltpu.get_tpu_info()
        cap = int(getattr(info, "vmem_capacity_bytes", cap))
    except Exception:
        pass
    budget = int(cap * 0.625)   # tile working-set target (~40 MiB v7x, ~80 MiB v5e/v6e)
    limit = int(cap * 0.85)     # scoped-VMEM limit handed to Mosaic
    return budget, limit


def _lane_divisors(total):
    """Multiples of 128 that divide `total` (total is already a multiple of 128)."""
    return sorted((c for c in range(128, total + 1, 128) if total % c == 0),
                  reverse=True)


def _pick_tiles(M, K, N, in_bytes, out_bytes, budget):
    """Choose (tm, tn, tk, use_k_axis) for padded dims (M, K, N)."""
    tm = M if M <= 256 else 256          # M is padded so that tm always divides it

    tn_cands = _lane_divisors(N)
    tk_cands = _lane_divisors(K)

    # Guarantee >=2 blocks along the N axis when the problem is big enough for
    # pipelining / the v7x dual-TensorCore split to matter.
    working_set = in_bytes * (M * K + N * K) + out_bytes * M * N
    if working_set > (2 << 20) and N >= 256:
        capped = [c for c in tn_cands if N // c >= 2]
        if capped:
            tn_cands = capped

    def footprint(tn, tk, with_acc):
        fp = 2 * in_bytes * tk * (tm + tn)   # double-buffered x and weight tiles
        fp += 2 * 4 * 8 * tn                 # bias tile ((1,tn) is physically (8,tn))
        fp += 2 * out_bytes * tm * tn        # double-buffered output tile
        if with_acc:
            fp += 4 * tm * tn                # f32 accumulator scratch (single buffer)
        return fp

    # Fast path: full-K contraction (no K axis, no accumulator) with headroom.
    for tn in tn_cands:
        if footprint(tn, K, False) <= budget // 2:
            return tm, tn, K, False

    # K-tiled path: maximize tn first (cuts activation re-reads), then tk.
    for tn in tn_cands:
        for tk in tk_cands:
            if footprint(tn, tk, True) <= budget:
                return tm, tn, tk, True

    # Last resort: minimal lane-aligned tiles (always fits).
    return tm, 128, 128, True


def _linear_kernel_fullk(x_ref, w_ref, b_ref, o_ref):
    """One (tm, tn) output tile, full-K contraction, fused bias add + cast."""
    acc = lax.dot_general(
        x_ref[...], w_ref[...],
        dimension_numbers=(((1,), (1,)), ((), ())),   # contract K against K (B^T)
        preferred_element_type=jnp.float32,
    )
    o_ref[...] = (acc + b_ref[...]).astype(o_ref.dtype)


def _linear_kernel_ktiled(x_ref, w_ref, b_ref, o_ref, acc_ref):
    """K-tiled accumulation: init at k==0, finalize (bias + cast) at last k."""
    k = pl.program_id(2)

    @pl.when(k == 0)
    def _():
        acc_ref[...] = jnp.zeros_like(acc_ref)

    acc_ref[...] += lax.dot_general(
        x_ref[...], w_ref[...],
        dimension_numbers=(((1,), (1,)), ((), ())),
        preferred_element_type=jnp.float32,
    )

    @pl.when(k == pl.num_programs(2) - 1)
    def _():
        o_ref[...] = (acc_ref[...] + b_ref[...]).astype(o_ref.dtype)


@functools.partial(jax.jit, static_argnames=("compute_dtype",))
def linear_pallas(x, weight, bias, *, compute_dtype=None):
    """nn.Linear forward: y = x @ weight.T + bias.

    x:      (M, K) activations
    weight: (N, K) PyTorch nn.Linear layout (out_features, in_features)
    bias:   (N,)
    compute_dtype: optional (e.g. jnp.bfloat16) to halve the weight HBM stream;
                   accumulation stays f32 and the output keeps x.dtype.
    """
    M, K = x.shape
    N, K2 = weight.shape
    assert K == K2 and bias.shape == (N,)
    out_dtype = x.dtype

    if compute_dtype is not None:
        x = x.astype(compute_dtype)
        weight = weight.astype(compute_dtype)

    # Pad to (8, 128)-friendly sizes so every block (and the output store) is
    # lane/sublane dense.  Zero padding along K contributes nothing to the
    # matmul; padded M rows / N columns are sliced off at the end.
    Mp = _round_up(M, 8) if M <= 256 else _round_up(M, 256)
    Kp = _round_up(K, 128)
    Np = _round_up(N, 128)

    xp = x if (Mp == M and Kp == K) else jnp.pad(x, ((0, Mp - M), (0, Kp - K)))
    wp = weight if (Np == N and Kp == K) else jnp.pad(weight, ((0, Np - N), (0, Kp - K)))
    bp = bias if Np == N else jnp.pad(bias, (0, Np - N))
    b2d = bp.reshape(1, Np).astype(jnp.float32)

    in_bytes = jnp.dtype(xp.dtype).itemsize
    out_bytes = jnp.dtype(out_dtype).itemsize
    budget, vmem_limit = _vmem_budget_and_limit()
    tm, tn, tk, use_k_axis = _pick_tiles(Mp, Kp, Np, in_bytes, out_bytes, budget)

    m_t, n_t, k_t = Mp // tm, Np // tn, Kp // tk

    if use_k_axis:
        grid = (n_t, m_t, k_t)                     # K last ("arbitrary") for the accumulator
        in_specs = [
            pl.BlockSpec((tm, tk), lambda j, i, k: (i, k)),   # x rows
            pl.BlockSpec((tn, tk), lambda j, i, k: (j, k)),   # weight in (out, in) layout
            pl.BlockSpec((1, tn), lambda j, i, k: (0, j)),    # bias
        ]
        out_specs = pl.BlockSpec((tm, tn), lambda j, i, k: (i, j))
        dim_sem = ("parallel", "parallel", "arbitrary")
        scratch = [pltpu.VMEM((tm, tn), jnp.float32)]
        kernel = _linear_kernel_ktiled
        x_reads, w_reads = n_t, m_t
    else:
        # Full-K: keep whichever operand costs more to re-stream resident across
        # the inner grid axis (its block index is constant there -> read once).
        n_outer = (n_t - 1) * Mp * Kp <= (m_t - 1) * Np * Kp
        if n_outer:
            grid = (n_t, m_t)                      # weight streamed once, x re-read n_t times
            in_specs = [
                pl.BlockSpec((tm, Kp), lambda j, i: (i, 0)),
                pl.BlockSpec((tn, Kp), lambda j, i: (j, 0)),
                pl.BlockSpec((1, tn), lambda j, i: (0, j)),
            ]
            out_specs = pl.BlockSpec((tm, tn), lambda j, i: (i, j))
            x_reads, w_reads = n_t, 1
        else:
            grid = (m_t, n_t)                      # x streamed once, weight re-read m_t times
            in_specs = [
                pl.BlockSpec((tm, Kp), lambda i, j: (i, 0)),
                pl.BlockSpec((tn, Kp), lambda i, j: (j, 0)),
                pl.BlockSpec((1, tn), lambda i, j: (0, j)),
            ]
            out_specs = pl.BlockSpec((tm, tn), lambda i, j: (i, j))
            x_reads, w_reads = 1, m_t
        dim_sem = ("parallel", "parallel")
        scratch = []
        kernel = _linear_kernel_fullk

    cost = pl.CostEstimate(
        flops=2 * Mp * Np * Kp,
        transcendentals=0,
        bytes_accessed=(in_bytes * (Mp * Kp * x_reads + Np * Kp * w_reads)
                        + 4 * Np + out_bytes * Mp * Np),
    )

    out_p = pl.pallas_call(
        kernel,
        out_shape=jax.ShapeDtypeStruct((Mp, Np), out_dtype),
        grid=grid,
        in_specs=in_specs,
        out_specs=out_specs,
        scratch_shapes=scratch,
        compiler_params=pltpu.CompilerParams(
            dimension_semantics=dim_sem,
            vmem_limit_bytes=vmem_limit,
        ),
        cost_estimate=cost,
    )(xp, wp, b2d)

    return out_p[:M, :N] if (Mp != M or Np != N) else out_p


if __name__ == "__main__":
    # Small shapes consistent with Model(input_size=5000, output_size=20000),
    # scaled down 10x; intentionally not 128-aligned to exercise the padding path.
    # TODO(synk): the PyTorch forward also print()s the input/output sizes — a
    # host-side debug side effect with no kernel equivalent; omitted.
    batch, in_features, out_features = 8, 500, 2000

    key = jax.random.PRNGKey(0)
    kx, kw, kb = jax.random.split(key, 3)

    x = jax.random.normal(kx, (batch, in_features), dtype=jnp.float32)
    bound = 1.0 / (in_features ** 0.5)
    weight = jax.random.uniform(
        kw, (out_features, in_features), minval=-bound, maxval=bound,
        dtype=jnp.float32)
    bias = jax.random.uniform(
        kb, (out_features,), minval=-bound, maxval=bound, dtype=jnp.float32)

    out = linear_pallas(x, weight, bias)
    out = jax.block_until_ready(out)

    # Correctness check against the plain-JAX nn.Linear forward.
    ref = x @ weight.T + bias
    assert out.shape == (batch, out_features)
    assert jnp.allclose(out, ref, atol=1e-4, rtol=1e-4)

    print("KERNEL_OK")
</pallas_src>

<mosaic_0001>
module attributes {stable_mosaic.version = 11 : i64} {
  func.func @_linear_kernel_fullk(%arg0: i32, %arg1: i32, %arg2: memref<8x512xf32, #tpu.memory_space<vmem>>, %arg3: memref<1024x512xf32, #tpu.memory_space<vmem>>, %arg4: memref<1x1024xf32, #tpu.memory_space<vmem>>, %arg5: memref<8x1024xf32, #tpu.memory_space<vmem>>) attributes {dimension_semantics = [#tpu.dimension_semantics<parallel>, #tpu.dimension_semantics<parallel>], iteration_bounds = array<i64: 1, 2>, scalar_prefetch = 0 : i64, scratch_operands = 0 : i64, tpu.core_type = #tpu.core_type<tc>, window_params = [{transform_indices = @transform_0, window_bounds = array<i64: 8, 512>}, {transform_indices = @transform_1, window_bounds = array<i64: 1024, 512>}, {transform_indices = @transform_2, window_bounds = array<i64: 1, 1024>}, {transform_indices = @transform_3, window_bounds = array<i64: 8, 1024>}]} {
    %c0 = arith.constant 0 : index
    %c0_0 = arith.constant 0 : index
    %0 = vector.load %arg2[%c0, %c0_0] : memref<8x512xf32, #tpu.memory_space<vmem>>, vector<8x512xf32>
    %c0_1 = arith.constant 0 : index
    %c0_2 = arith.constant 0 : index
    %1 = vector.load %arg3[%c0_1, %c0_2] : memref<1024x512xf32, #tpu.memory_space<vmem>>, vector<1024x512xf32>
    %cst = arith.constant dense<0.000000e+00> : vector<8x1024xf32>
    %2 = tpu.matmul %0, %1, %cst {dimension_numbers = #tpu.dot_dimension_numbers<[1], [1], [0], [0], [0, 0, 1, 0], [], []>} : vector<8x512xf32>, vector<1024x512xf32>, vector<8x1024xf32> -> vector<8x1024xf32>
    %c0_3 = arith.constant 0 : index
    %c0_4 = arith.constant 0 : index
    %3 = vector.load %arg4[%c0_3, %c0_4] : memref<1x1024xf32, #tpu.memory_space<vmem>>, vector<1x1024xf32>
    %4 = vector.broadcast %3 : vector<1x1024xf32> to vector<8x1024xf32>
    %5 = arith.addf %2, %4 : vector<8x1024xf32>
    %c0_5 = arith.constant 0 : index
    %c0_6 = arith.constant 0 : index
    %6 = vector.load %arg5[%c0_5, %c0_6] : memref<8x1024xf32, #tpu.memory_space<vmem>>, vector<8x1024xf32>
    tpu.vector_store %arg5[%c0_5, %c0_6], %5 {strides = array<i32>} : memref<8x1024xf32, #tpu.memory_space<vmem>>, vector<8x1024xf32>,
    return
  }
  func.func @transform_0(%arg0: i32, %arg1: i32) -> (i32, i32) {
    %c0_i32 = arith.constant 0 : i32
    %c0_i32_0 = arith.constant 0 : i32
    return %arg0, %c0_i32 : i32, i32
  }
  func.func @transform_1(%arg0: i32, %arg1: i32) -> (i32, i32) {
    %c0_i32 = arith.constant 0 : i32
    %c0_i32_0 = arith.constant 0 : i32
    return %arg1, %c0_i32 : i32, i32
  }
  func.func @transform_2(%arg0: i32, %arg1: i32) -> (i32, i32) {
    %c0_i32 = arith.constant 0 : i32
    %c0_i32_0 = arith.constant 0 : i32
    return %c0_i32, %arg1 : i32, i32
  }
  func.func @transform_3(%arg0: i32, %arg1: i32) -> (i32, i32) {
    %c0_i32 = arith.constant 0 : i32
    return %arg0, %arg1 : i32, i32
  }
}

</mosaic_0001>

<llo_original>
// kernel: linear_pallas.1
$region0: #{linear_pallas.1}
  #allocation0 [shape = 'u32[]', space=smem, size = 0x4, offset = 0x4, fixed_abs, tag = 'smem constant byte address 0x4 - core index']
  #allocation1 [shape = 'u32[144,128]{1,0:T(1,128)}', space=vmem, size = 0x12000, scoped, tag = 'internal scratch']
  %s0 = inlined_call_operand.vmem [shape: f32[8,512], index: 0, kind: input, shape index: {}]
  %s1 = inlined_call_operand.vmem [shape: f32[2048,512], index: 1, kind: input, shape index: {}]
  %s2 = inlined_call_operand.vmem [shape: f32[1,2048], index: 2, kind: input, shape index: {}]
  %s3 = inlined_call_operand.hbm [shape: f32[8,2048], index: 3, kind: output, shape index: {}]
  %s4 = sld [smem:[#allocation0]]
  $region45: #{linear_pallas.1} parent=0
    _
  %s6 = ssub.s32 1, %s4
  %s7 = scalar_select 0, %s6, %s4
  $region1: #{linear_pallas.1} parent=0
    #allocation2 [shape = 'u8[65536]{0}', space=vmem, size = 0x10000, scoped, tag = 'output window, operand 0']
    #allocation3 [shape = 's32[2]{0}', space=sflag, size = 0x8, scoped, tag = 'scoped memory for linear_pallas.1']
    %8 = vsyncpa [#allocation3], 0
    %s9 = scalar_lea.sflag [#allocation3], 1
    %10 = vsyncpa %s9, 0
    loop: start=0, step=1, limit=4
    $region2: #{linear_pallas.1} parent=1 // loop_pre_header
      _
    $region3: #{linear_pallas.1} parent=1 // loop_header
      %s12 = sphi 0, %s16
      %p13 = scmp.ge.s32.totalorder %s12, 4
      %s19 = sphi 0, %s31
      %s20 = sphi 0, %s27
      %s21 = sphi 0, %s19
      %s22 = sphi 0, %s20
      %s23 = sphi 0, %s21
      %s24 = sphi 0, %s22
      %s34 = sphi 0, %s36
      %s37 = sphi 0, %s34
      %s38 = sphi 0, %s37
      %s54 = sphi 0, %s38
      %s60 = sphi 0, %s62
      %s63 = sphi 0, %s60
      %s64 = sphi 0, %s63
      %s80 = sphi 0, %s64
      %s86 = sphi 0, %s88
      %s89 = sphi 0, %s86
      %s90 = sphi 0, %s89
      %s106 = sphi 0, %s90
      %s114 = sphi 0, %s116
      %s117 = sphi 0, %s114
      %s118 = sphi 0, %s117
      %s134 = sphi 0, %s118
    $region4: #{linear_pallas.1} parent=1 // loop_header_branch
      %15 = sbr.rel (%p13) target = $region8
    $region5: #{linear_pallas.1} parent=1 // loop_body
      %s17 = ssub.s32 %s12, 1
      %s18 = ssub.s32 %s12, 2
      %s25 = sadd.s32 1, %s20
      %p26 = scmp.ge.s32.totalorder %s25, 2
      %s27 = scalar_select %p26, 0, %s25
      %s28 = sadd.s32 1, %s19
      %s29 = scalar_select %p26, %s28, %s19
      %p30 = scmp.ge.s32.totalorder %s29, 1
      %s31 = scalar_select %p30, 0, %s29
      %s32 = ssub.s32 %s19, %s31
      %p33 = scmp.eq.s32.totalorder %s32, 0
      %s35 = sadd.s32 %s34, 1
      %s36 = scalar_select %p33, %s34, %s35
      %p39 = pneg %p33
      %p40 = scmp.eq.s32.totalorder %s12, 1
      %p41 = por %p39, %p40
      %p42 = scmp.ne.s32.totalorder %s34, %s37
      %p43 = scmp.eq.s32.totalorder %s12, 0
      %p44 = por %p42, %p43
      %p45 = scmp.ne.s32.totalorder %s34, %s37
      %p46 = scmp.eq.s32.totalorder %s17, 1
      %p47 = por %p45, %p46
      %p48 = scmp.ne.s32.totalorder %s37, %s38
      %p49 = scmp.eq.s32.totalorder %s17, 0
      %p50 = por %p48, %p49
      %p51 = scmp.ne.s32.totalorder %s37, %s38
      %p52 = scmp.eq.s32.totalorder %s18, 1
      %p53 = por %p51, %p52
      %p55 = scmp.ne.s32.totalorder %s38, %s54
      %p56 = scmp.eq.s32.totalorder %s18, 0
      %p57 = por %p55, %p56
      %s58 = ssub.s32 %s20, %s27
      %p59 = scmp.eq.s32.totalorder %s58, 0
      %s61 = sadd.s32 %s60, 1
      %s62 = scalar_select %p59, %s60, %s61
      %p65 = pneg %p59
      %p66 = scmp.eq.s32.totalorder %s12, 1
      %p67 = por %p65, %p66
      %p68 = scmp.ne.s32.totalorder %s60, %s63
      %p69 = scmp.eq.s32.totalorder %s12, 0
      %p70 = por %p68, %p69
      %p71 = scmp.ne.s32.totalorder %s60, %s63
      %p72 = scmp.eq.s32.totalorder %s17, 1
      %p73 = por %p71, %p72
      %p74 = scmp.ne.s32.totalorder %s63, %s64
      %p75 = scmp.eq.s32.totalorder %s17, 0
      %p76 = por %p74, %p75
      %p77 = scmp.ne.s32.totalorder %s63, %s64
      %p78 = scmp.eq.s32.totalorder %s18, 1
      %p79 = por %p77, %p78
      %p81 = scmp.ne.s32.totalorder %s64, %s80
      %p82 = scmp.eq.s32.totalorder %s18, 0
      %p83 = por %p81, %p82
      %s84 = ssub.s32 %s20, %s27
      %p85 = scmp.eq.s32.totalorder %s84, 0
      %s87 = sadd.s32 %s86, 1
      %s88 = scalar_select %p85, %s86, %s87
      %p91 = pneg %p85
      %p92 = scmp.eq.s32.totalorder %s12, 1
      %p93 = por %p91, %p92
      %p94 = scmp.ne.s32.totalorder %s86, %s89
      %p95 = scmp.eq.s32.totalorder %s12, 0
      %p96 = por %p94, %p95
      %p97 = scmp.ne.s32.totalorder %s86, %s89
      %p98 = scmp.eq.s32.totalorder %s17, 1
      %p99 = por %p97, %p98
      %p100 = scmp.ne.s32.totalorder %s89, %s90
      %p101 = scmp.eq.s32.totalorder %s17, 0
      %p102 = por %p100, %p101
      %p103 = scmp.ne.s32.totalorder %s89, %s90
      %p104 = scmp.eq.s32.totalorder %s18, 1
      %p105 = por %p103, %p104
      %p107 = scmp.ne.s32.totalorder %s90, %s106
      %p108 = scmp.eq.s32.totalorder %s18, 0
      %p109 = por %p107, %p108
      %s110 = ssub.s32 %s19, %s31
      %s111 = ssub.s32 %s20, %s27
      %s112 = sor.u32 %s110, %s111
      %p113 = scmp.eq.s32.totalorder %s112, 0
      %s115 = sadd.s32 %s114, 1
      %s116 = scalar_select %p113, %s114, %s115
      %p119 = pneg %p113
      %p120 = scmp.eq.s32.totalorder %s12, 1
      %p121 = por %p119, %p120
      %p122 = scmp.ne.s32.totalorder %s114, %s117
      %p123 = scmp.eq.s32.totalorder %s12, 0
      %p124 = por %p122, %p123
      %p125 = scmp.ne.s32.totalorder %s114, %s117
      %p126 = scmp.eq.s32.totalorder %s17, 1
      %p127 = por %p125, %p126
      %p128 = scmp.ne.s32.totalorder %s117, %s118
      %p129 = scmp.eq.s32.totalorder %s17, 0
      %p130 = por %p128, %p129
      %p131 = scmp.ne.s32.totalorder %s117, %s118
      %p132 = scmp.eq.s32.totalorder %s18, 1
      %p133 = por %p131, %p132
      %p135 = scmp.ne.s32.totalorder %s118, %s134
      %p136 = scmp.eq.s32.totalorder %s18, 0
      %p137 = por %p135, %p136
      %p138 = scmp.le.s32.totalorder 1, %s12
      %p139 = scmp.lt.s32.totalorder %s12, 3
      %p140 = pnand %p138, %p139
      %p141 = pneg %p140
      // Predicated region
      $region9: #{linear_pallas.1} parent=5 // pred_check
        _
      $region10: #{linear_pallas.1} parent=5 // pred_check_branch
        %143 = sbr.rel (%p140) target = $region12
      $region11: #{linear_pallas.1} parent=5 // pred_region
        %s144 = ssub.s32 %s12, 1
        // Predicated region
        $region13: #{linear_pallas.1} parent=11 // pred_check
          %p145 = pneg %p50
        $region14: #{linear_pallas.1} parent=11 // pred_check_branch
          %147 = sbr.rel (%p145) target = $region16
        $region15: #{linear_pallas.1} parent=11 // pred_region
          %p148 = scmp.lt.s32.totalorder %s21, 0
          %s149 = scalar_select %p148, %s21, 0
          %s150 = smul.addr %s149, 4
          %s151 = smul.addr %s150, 8
          %s152 = scalar_lea.vmem %s0, %s151
        $region16: #{linear_pallas.1} parent=11 // pred_fallthru
          _
      $region12: #{linear_pallas.1} parent=5 // pred_fallthru
        _
      %p153 = scmp.lt.s32.totalorder %s12, 2
      // Predicated region
      $region17: #{linear_pallas.1} parent=5 // pred_check
        %p154 = pneg %p153
      $region18: #{linear_pallas.1} parent=5 // pred_check_branch
        %156 = sbr.rel (%p154) target = $region20
      $region19: #{linear_pallas.1} parent=5 // pred_region
        // Predicated region
        $region21: #{linear_pallas.1} parent=19 // pred_check
          %p157 = pneg %p70
        $region22: #{linear_pallas.1} parent=19 // pred_check_branch
          %159 = sbr.rel (%p157) target = $region24
        $region23: #{linear_pallas.1} parent=19 // pred_region
          %s160 = smul.u32 128, %s20
          %p161 = scmp.lt.s32.totalorder %s160, 255
          %s162 = scalar_select %p161, %s160, 255
          %s163 = smul.addr %s162, 4
          %s164 = smul.addr %s163, 8
          %s165 = scalar_lea.vmem %s1, %s164
          %s166 = smul.u32 128, %s20
        $region24: #{linear_pallas.1} parent=19 // pred_fallthru
          _
        // Predicated region
        $region25: #{linear_pallas.1} parent=19 // pred_check
          %p167 = pneg %p96
        $region26: #{linear_pallas.1} parent=19 // pred_check_branch
          %169 = sbr.rel (%p167) target = $region28
        $region27: #{linear_pallas.1} parent=19 // pred_region
          %s170 = smul.u32 8, %s20
          %p171 = scmp.lt.s32.totalorder %s170, 15
          %s172 = scalar_select %p171, %s170, 15
          %s173 = scalar_lea.vmem %s2, %s172
          %s174 = smul.u32 8, %s20
        $region28: #{linear_pallas.1} parent=19 // pred_fallthru
          _
      $region20: #{linear_pallas.1} parent=5 // pred_fallthru
        _
      %p175 = scmp.le.s32.totalorder 1, %s12
      %p176 = scmp.lt.s32.totalorder %s12, 3
      %p177 = pnand %p175, %p176
      %p178 = pneg %p177
      // Predicated region
      $region29: #{linear_pallas.1} parent=5 // pred_check
        _
      $region30: #{linear_pallas.1} parent=5 // pred_check_branch
        %180 = sbr.rel (%p177) target = $region32
      $region31: #{linear_pallas.1} parent=5 // pred_region
        %s181 = ssub.s32 %s12, 1
        %p182 = scmp.lt.s32.totalorder %s21, 0
        %s183 = scalar_select %p182, %s21, 0
        %s184 = smul.addr %s183, 4
        %s185 = smul.addr %s184, 8
        %s186 = scalar_lea.vmem %s0, %s185
        %p187 = pneg %p50
        %p188 = pneg %p47
        %s189 = smul.u32 128, %s22
        %p190 = scmp.lt.s32.totalorder %s189, 255
        %s191 = scalar_select %p190, %s189, 255
        %s192 = smul.addr %s191, 4
        %s193 = smul.addr %s192, 8
        %s194 = scalar_lea.vmem %s1, %s193
        %p195 = pneg %p76
        %p196 = pneg %p73
        %s197 = smul.u32 8, %s22
        %p198 = scmp.lt.s32.totalorder %s197, 15
        %s199 = scalar_select %p198, %s197, 15
        %s200 = scalar_lea.vmem %s2, %s199
        %p201 = pneg %p102
        %p202 = pneg %p99
        %p203 = pneg %p130
        %p204 = pneg %p127
        %s205 = sand.u32 %s117, 1
        %s206 = scalar_lea.sflag [#allocation3], %s205
        %s207 = sand.u32 %s117, 1
        %s208 = smul.addr %s207, 64
        %s209 = scalar_lea.vmem [#allocation2], %s208
        %p210 = scmp.lt.s32.totalorder %s21, 0
        %s211 = scalar_select %p210, %s21, 0
        %s212 = smul.addr %s211, 4
        %s213 = smul.addr %s212, 8
        %s214 = scalar_lea.vmem %s0, %s213
        %s215 = smul.u32 128, %s22
        %p216 = scmp.lt.s32.totalorder %s215, 255
        %s217 = scalar_select %p216, %s215, 255
        %s218 = smul.addr %s217, 4
        %s219 = smul.addr %s218, 8
        %s220 = scalar_lea.vmem %s1, %s219
        %s221 = smul.u32 128, %s22
        %s222 = smul.u32 8, %s22
        %p223 = scmp.lt.s32.totalorder %s222, 15
        %s224 = scalar_select %p223, %s222, 15
        %s225 = scalar_lea.vmem %s2, %s224
        %s226 = smul.u32 8, %s22
        %s227 = smul.u32 8, %s22
        %v228 = vld [vmem:[%s214] sm:$0xff]
        %v229 = vld [vmem:[%s214 + $0x8] sm:$0xff]
        %v230 = vld [vmem:[%s214 + $0x10] sm:$0xff]
        %v231 = vld [vmem:[%s214 + $0x18] sm:$0xff]
        %v232 = vld [vmem:[%s220] sm:$0xff]
        %v233 = vld [vmem:[%s220 + $0x8] sm:$0xff]
        %v234 = vld [vmem:[%s220 + $0x10] sm:$0xff]
        %v235 = vld [vmem:[%s220 + $0x18] sm:$0xff]
        %v236 = vld [vmem:[%s220 + $0x20] sm:$0xff]
        %v237 = vld [vmem:[%s220 + $0x28] sm:$0xff]
        %v238 = vld [vmem:[%s220 + $0x30] sm:$0xff]
        %v239 = vld [vmem:[%s220 + $0x38] sm:$0xff]
        %v240 = vld [vmem:[%s220 + $0x40] sm:$0xff]
        %v241 = vld [vmem:[%s220 + $0x48] sm:$0xff]
        %v242 = vld [vmem:[%s220 + $0x50] sm:$0xff]
        %v243 = vld [vmem:[%s220 + $0x58] sm:$0xff]
        %v244 = vld [vmem:[%s220 + $0x60] sm:$0xff]
        %v245 = vld [vmem:[%s220 + $0x68] sm:$0xff]
        %v246 = vld [vmem:[%s220 + $0x70] sm:$0xff]
        %v247 = vld [vmem:[%s220 + $0x78] sm:$0xff]
        %v248 = vld [vmem:[%s220 + $0x80] sm:$0xff]
        %v249 = vld [vmem:[%s220 + $0x88] sm:$0xff]
        %v250 = vld [vmem:[%s220 + $0x90] sm:$0xff]
        %v251 = vld [vmem:[%s220 + $0x98] sm:$0xff]
        %v252 = vld [vmem:[%s220 + $0xa0] sm:$0xff]
        %v253 = vld [vmem:[%s220 + $0xa8] sm:$0xff]
        %v254 = vld [vmem:[%s220 + $0xb0] sm:$0xff]
        %v255 = vld [vmem:[%s220 + $0xb8] sm:$0xff]
        %v256 = vld [vmem:[%s220 + $0xc0] sm:$0xff]
        %v257 = vld [vmem:[%s220 + $0xc8] sm:$0xff]
        %v258 = vld [vmem:[%s220 + $0xd0] sm:$0xff]
        %v259 = vld [vmem:[%s220 + $0xd8] sm:$0xff]
        %v260 = vld [vmem:[%s220 + $0xe0] sm:$0xff]
        %v261 = vld [vmem:[%s220 + $0xe8] sm:$0xff]
        %v262 = vld [vmem:[%s220 + $0xf0] sm:$0xff]
        %v263 = vld [vmem:[%s220 + $0xf8] sm:$0xff]
        %v264 = vld [vmem:[%s220 + $0x100] sm:$0xff]
        %v265 = vld [vmem:[%s220 + $0x108] sm:$0xff]
        %v266 = vld [vmem:[%s220 + $0x110] sm:$0xff]
        %v267 = vld [vmem:[%s220 + $0x118] sm:$0xff]
        %v268 = vld [vmem:[%s220 + $0x120] sm:$0xff]
        %v269 = vld [vmem:[%s220 + $0x128] sm:$0xff]
        %v270 = vld [vmem:[%s220 + $0x130] sm:$0xff]
        %v271 = vld [vmem:[%s220 + $0x138] sm:$0xff]
        %v272 = vld [vmem:[%s220 + $0x140] sm:$0xff]
        %v273 = vld [vmem:[%s220 + $0x148] sm:$0xff]
        %v274 = vld [vmem:[%s220 + $0x150] sm:$0xff]
        %v275 = vld [vmem:[%s220 + $0x158] sm:$0xff]
        %v276 = vld [vmem:[%s220 + $0x160] sm:$0xff]
        %v277 = vld [vmem:[%s220 + $0x168] sm:$0xff]
        %v278 = vld [vmem:[%s220 + $0x170] sm:$0xff]
        %v279 = vld [vmem:[%s220 + $0x178] sm:$0xff]
        %v280 = vld [vmem:[%s220 + $0x180] sm:$0xff]
        %v281 = vld [vmem:[%s220 + $0x188] sm:$0xff]
        %v282 = vld [vmem:[%s220 + $0x190] sm:$0xff]
        %v283 = vld [vmem:[%s220 + $0x198] sm:$0xff]
        %v284 = vld [vmem:[%s220 + $0x1a0] sm:$0xff]
        %v285 = vld [vmem:[%s220 + $0x1a8] sm:$0xff]
        %v286 = vld [vmem:[%s220 + $0x1b0] sm:$0xff]
        %v287 = vld [vmem:[%s220 + $0x1b8] sm:$0xff]
        %v288 = vld [vmem:[%s220 + $0x1c0] sm:$0xff]
        %v289 = vld [vmem:[%s220 + $0x1c8] sm:$0xff]
        %v290 = vld [vmem:[%s220 + $0x1d0] sm:$0xff]
        %v291 = vld [vmem:[%s220 + $0x1d8] sm:$0xff]
        %v292 = vld [vmem:[%s220 + $0x1e0] sm:$0xff]
        %v293 = vld [vmem:[%s220 + $0x1e8] sm:$0xff]
        %v294 = vld [vmem:[%s220 + $0x1f0] sm:$0xff]
        %v295 = vld [vmem:[%s220 + $0x1f8] sm:$0xff]
        %v296 = vld [vmem:[%s220 + $0x200] sm:$0xff]
        %v297 = vld [vmem:[%s220 + $0x208] sm:$0xff]
        %v298 = vld [vmem:[%s220 + $0x210] sm:$0xff]
        %v299 = vld [vmem:[%s220 + $0x218] sm:$0xff]
        %v300 = vld [vmem:[%s220 + $0x220] sm:$0xff]
        %v301 = vld [vmem:[%s220 + $0x228] sm:$0xff]
        %v302 = vld [vmem:[%s220 + $0x230] sm:$0xff]
        %v303 = vld [vmem:[%s220 + $0x238] sm:$0xff]
        %v304 = vld [vmem:[%s220 + $0x240] sm:$0xff]
        %v305 = vld [vmem:[%s220 + $0x248] sm:$0xff]
        %v306 = vld [vmem:[%s220 + $0x250] sm:$0xff]
        %v307 = vld [vmem:[%s220 + $0x258] sm:$0xff]
        %v308 = vld [vmem:[%s220 + $0x260] sm:$0xff]
        %v309 = vld [vmem:[%s220 + $0x268] sm:$0xff]
        %v310 = vld [vmem:[%s220 + $0x270] sm:$0xff]
        %v311 = vld [vmem:[%s220 + $0x278] sm:$0xff]
        %v312 = vld [vmem:[%s220 + $0x280] sm:$0xff]
        %v313 = vld [vmem:[%s220 + $0x288] sm:$0xff]
        %v314 = vld [vmem:[%s220 + $0x290] sm:$0xff]
        %v315 = vld [vmem:[%s220 + $0x298] sm:$0xff]
        %v316 = vld [vmem:[%s220 + $0x2a0] sm:$0xff]
        %v317 = vld [vmem:[%s220 + $0x2a8] sm:$0xff]
        %v318 = vld [vmem:[%s220 + $0x2b0] sm:$0xff]
        %v319 = vld [vmem:[%s220 + $0x2b8] sm:$0xff]
        %v320 = vld [vmem:[%s220 + $0x2c0] sm:$0xff]
        %v321 = vld [vmem:[%s220 + $0x2c8] sm:$0xff]
        %v322 = vld [vmem:[%s220 + $0x2d0] sm:$0xff]
        %v323 = vld [vmem:[%s220 + $0x2d8] sm:$0xff]
        %v324 = vld [vmem:[%s220 + $0x2e0] sm:$0xff]
        %v325 = vld [vmem:[%s220 + $0x2e8] sm:$0xff]
        %v326 = vld [vmem:[%s220 + $0x2f0] sm:$0xff]
        %v327 = vld [vmem:[%s220 + $0x2f8] sm:$0xff]
        %v328 = vld [vmem:[%s220 + $0x300] sm:$0xff]
        %v329 = vld [vmem:[%s220 + $0x308] sm:$0xff]
        %v330 = vld [vmem:[%s220 + $0x310] sm:$0xff]
        %v331 = vld [vmem:[%s220 + $0x318] sm:$0xff]
        %v332 = vld [vmem:[%s220 + $0x320] sm:$0xff]
        %v333 = vld [vmem:[%s220 + $0x328] sm:$0xff]
        %v334 = vld [vmem:[%s220 + $0x330] sm:$0xff]
        %v335 = vld [vmem:[%s220 + $0x338] sm:$0xff]
        %v336 = vld [vmem:[%s220 + $0x340] sm:$0xff]
        %v337 = vld [vmem:[%s220 + $0x348] sm:$0xff]
        %v338 = vld [vmem:[%s220 + $0x350] sm:$0xff]
        %v339 = vld [vmem:[%s220 + $0x358] sm:$0xff]
        %v340 = vld [vmem:[%s220 + $0x360] sm:$0xff]
        %v341 = vld [vmem:[%s220 + $0x368] sm:$0xff]
        %v342 = vld [vmem:[%s220 + $0x370] sm:$0xff]
        %v343 = vld [vmem:[%s220 + $0x378] sm:$0xff]
        %v344 = vld [vmem:[%s220 + $0x380] sm:$0xff]
        %v345 = vld [vmem:[%s220 + $0x388] sm:$0xff]
        %v346 = vld [vmem:[%s220 + $0x390] sm:$0xff]
        %v347 = vld [vmem:[%s220 + $0x398] sm:$0xff]
        %v348 = vld [vmem:[%s220 + $0x3a0] sm:$0xff]
        %v349 = vld [vmem:[%s220 + $0x3a8] sm:$0xff]
        %v350 = vld [vmem:[%s220 + $0x3b0] sm:$0xff]
        %v351 = vld [vmem:[%s220 + $0x3b8] sm:$0xff]
        %v352 = vld [vmem:[%s220 + $0x3c0] sm:$0xff]
        %v353 = vld [vmem:[%s220 + $0x3c8] sm:$0xff]
        %v354 = vld [vmem:[%s220 + $0x3d0] sm:$0xff]
        %v355 = vld [vmem:[%s220 + $0x3d8] sm:$0xff]
        %v356 = vld [vmem:[%s220 + $0x3e0] sm:$0xff]
        %v357 = vld [vmem:[%s220 + $0x3e8] sm:$0xff]
        %v358 = vld [vmem:[%s220 + $0x3f0] sm:$0xff]
        %v359 = vld [vmem:[%s220 + $0x3f8] sm:$0xff]
        %v360 = vld [vmem:[%s220 + $0x400] sm:$0xff]
        %v361 = vld [vmem:[%s220 + $0x408] sm:$0xff]
        %v362 = vld [vmem:[%s220 + $0x410] sm:$0xff]
        %v363 = vld [vmem:[%s220 + $0x418] sm:$0xff]
        %v364 = vld [vmem:[%s220 + $0x420] sm:$0xff]
        %v365 = vld [vmem:[%s220 + $0x428] sm:$0xff]
        %v366 = vld [vmem:[%s220 + $0x430] sm:$0xff]
        %v367 = vld [vmem:[%s220 + $0x438] sm:$0xff]
        %v368 = vld [vmem:[%s220 + $0x440] sm:$0xff]
        %v369 = vld [vmem:[%s220 + $0x448] sm:$0xff]
        %v370 = vld [vmem:[%s220 + $0x450] sm:$0xff]
        %v371 = vld [vmem:[%s220 + $0x458] sm:$0xff]
        %v372 = vld [vmem:[%s220 + $0x460] sm:$0xff]
        %v373 = vld [vmem:[%s220 + $0x468] sm:$0xff]
        %v374 = vld [vmem:[%s220 + $0x470] sm:$0xff]
        %v375 = vld [vmem:[%s220 + $0x478] sm:$0xff]
        %v376 = vld [vmem:[%s220 + $0x480] sm:$0xff]
        %v377 = vld [vmem:[%s220 + $0x488] sm:$0xff]
        %v378 = vld [vmem:[%s220 + $0x490] sm:$0xff]
        %v379 = vld [vmem:[%s220 + $0x498] sm:$0xff]
        %v380 = vld [vmem:[%s220 + $0x4a0] sm:$0xff]
        %v381 = vld [vmem:[%s220 + $0x4a8] sm:$0xff]
        %v382 = vld [vmem:[%s220 + $0x4b0] sm:$0xff]
        %v383 = vld [vmem:[%s220 + $0x4b8] sm:$0xff]
        %v384 = vld [vmem:[%s220 + $0x4c0] sm:$0xff]
        %v385 = vld [vmem:[%s220 + $0x4c8] sm:$0xff]
        %v386 = vld [vmem:[%s220 + $0x4d0] sm:$0xff]
        %v387 = vld [vmem:[%s220 + $0x4d8] sm:$0xff]
        %v388 = vld [vmem:[%s220 + $0x4e0] sm:$0xff]
        %v389 = vld [vmem:[%s220 + $0x4e8] sm:$0xff]
        %v390 = vld [vmem:[%s220 + $0x4f0] sm:$0xff]
        %v391 = vld [vmem:[%s220 + $0x4f8] sm:$0xff]
        %v392 = vld [vmem:[%s220 + $0x500] sm:$0xff]
        %v393 = vld [vmem:[%s220 + $0x508] sm:$0xff]
        %v394 = vld [vmem:[%s220 + $0x510] sm:$0xff]
        %v395 = vld [vmem:[%s220 + $0x518] sm:$0xff]
        %v396 = vld [vmem:[%s220 + $0x520] sm:$0xff]
        %v397 = vld [vmem:[%s220 + $0x528] sm:$0xff]
        %v398 = vld [vmem:[%s220 + $0x530] sm:$0xff]
        %v399 = vld [vmem:[%s220 + $0x538] sm:$0xff]
        %v400 = vld [vmem:[%s220 + $0x540] sm:$0xff]
        %v401 = vld [vmem:[%s220 + $0x548] sm:$0xff]
        %v402 = vld [vmem:[%s220 + $0x550] sm:$0xff]
        %v403 = vld [vmem:[%s220 + $0x558] sm:$0xff]
        %v404 = vld [vmem:[%s220 + $0x560] sm:$0xff]
        %v405 = vld [vmem:[%s220 + $0x568] sm:$0xff]
        %v406 = vld [vmem:[%s220 + $0x570] sm:$0xff]
        %v407 = vld [vmem:[%s220 + $0x578] sm:$0xff]
        %v408 = vld [vmem:[%s220 + $0x580] sm:$0xff]
        %v409 = vld [vmem:[%s220 + $0x588] sm:$0xff]
        %v410 = vld [vmem:[%s220 + $0x590] sm:$0xff]
        %v411 = vld [vmem:[%s220 + $0x598] sm:$0xff]
        %v412 = vld [vmem:[%s220 + $0x5a0] sm:$0xff]
        %v413 = vld [vmem:[%s220 + $0x5a8] sm:$0xff]
        %v414 = vld [vmem:[%s220 + $0x5b0] sm:$0xff]
        %v415 = vld [vmem:[%s220 + $0x5b8] sm:$0xff]
        %v416 = vld [vmem:[%s220 + $0x5c0] sm:$0xff]
        %v417 = vld [vmem:[%s220 + $0x5c8] sm:$0xff]
        %v418 = vld [vmem:[%s220 + $0x5d0] sm:$0xff]
        %v419 = vld [vmem:[%s220 + $0x5d8] sm:$0xff]
        %v420 = vld [vmem:[%s220 + $0x5e0] sm:$0xff]
        %v421 = vld [vmem:[%s220 + $0x5e8] sm:$0xff]
        %v422 = vld [vmem:[%s220 + $0x5f0] sm:$0xff]
        %v423 = vld [vmem:[%s220 + $0x5f8] sm:$0xff]
        %v424 = vld [vmem:[%s220 + $0x600] sm:$0xff]
        %v425 = vld [vmem:[%s220 + $0x608] sm:$0xff]
        %v426 = vld [vmem:[%s220 + $0x610] sm:$0xff]
        %v427 = vld [vmem:[%s220 + $0x618] sm:$0xff]
        %v428 = vld [vmem:[%s220 + $0x620] sm:$0xff]
        %v429 = vld [vmem:[%s220 + $0x628] sm:$0xff]
        %v430 = vld [vmem:[%s220 + $0x630] sm:$0xff]
        %v431 = vld [vmem:[%s220 + $0x638] sm:$0xff]
        %v432 = vld [vmem:[%s220 + $0x640] sm:$0xff]
        %v433 = vld [vmem:[%s220 + $0x648] sm:$0xff]
        %v434 = vld [vmem:[%s220 + $0x650] sm:$0xff]
        %v435 = vld [vmem:[%s220 + $0x658] sm:$0xff]
        %v436 = vld [vmem:[%s220 + $0x660] sm:$0xff]
        %v437 = vld [vmem:[%s220 + $0x668] sm:$0xff]
        %v438 = vld [vmem:[%s220 + $0x670] sm:$0xff]
        %v439 = vld [vmem:[%s220 + $0x678] sm:$0xff]
        %v440 = vld [vmem:[%s220 + $0x680] sm:$0xff]
        %v441 = vld [vmem:[%s220 + $0x688] sm:$0xff]
        %v442 = vld [vmem:[%s220 + $0x690] sm:$0xff]
        %v443 = vld [vmem:[%s220 + $0x698] sm:$0xff]
        %v444 = vld [vmem:[%s220 + $0x6a0] sm:$0xff]
        %v445 = vld [vmem:[%s220 + $0x6a8] sm:$0xff]
        %v446 = vld [vmem:[%s220 + $0x6b0] sm:$0xff]
        %v447 = vld [vmem:[%s220 + $0x6b8] sm:$0xff]
        %v448 = vld [vmem:[%s220 + $0x6c0] sm:$0xff]
        %v449 = vld [vmem:[%s220 + $0x6c8] sm:$0xff]
        %v450 = vld [vmem:[%s220 + $0x6d0] sm:$0xff]
        %v451 = vld [vmem:[%s220 + $0x6d8] sm:$0xff]
        %v452 = vld [vmem:[%s220 + $0x6e0] sm:$0xff]
        %v453 = vld [vmem:[%s220 + $0x6e8] sm:$0xff]
        %v454 = vld [vmem:[%s220 + $0x6f0] sm:$0xff]
        %v455 = vld [vmem:[%s220 + $0x6f8] sm:$0xff]
        %v456 = vld [vmem:[%s220 + $0x700] sm:$0xff]
        %v457 = vld [vmem:[%s220 + $0x708] sm:$0xff]
        %v458 = vld [vmem:[%s220 + $0x710] sm:$0xff]
        %v459 = vld [vmem:[%s220 + $0x718] sm:$0xff]
        %v460 = vld [vmem:[%s220 + $0x720] sm:$0xff]
        %v461 = vld [vmem:[%s220 + $0x728] sm:$0xff]
        %v462 = vld [vmem:[%s220 + $0x730] sm:$0xff]
        %v463 = vld [vmem:[%s220 + $0x738] sm:$0xff]
        %v464 = vld [vmem:[%s220 + $0x740] sm:$0xff]
        %v465 = vld [vmem:[%s220 + $0x748] sm:$0xff]
        %v466 = vld [vmem:[%s220 + $0x750] sm:$0xff]
        %v467 = vld [vmem:[%s220 + $0x758] sm:$0xff]
        %v468 = vld [vmem:[%s220 + $0x760] sm:$0xff]
        %v469 = vld [vmem:[%s220 + $0x768] sm:$0xff]
        %v470 = vld [vmem:[%s220 + $0x770] sm:$0xff]
        %v471 = vld [vmem:[%s220 + $0x778] sm:$0xff]
        %v472 = vld [vmem:[%s220 + $0x780] sm:$0xff]
        %v473 = vld [vmem:[%s220 + $0x788] sm:$0xff]
        %v474 = vld [vmem:[%s220 + $0x790] sm:$0xff]
        %v475 = vld [vmem:[%s220 + $0x798] sm:$0xff]
        %v476 = vld [vmem:[%s220 + $0x7a0] sm:$0xff]
        %v477 = vld [vmem:[%s220 + $0x7a8] sm:$0xff]
        %v478 = vld [vmem:[%s220 + $0x7b0] sm:$0xff]
        %v479 = vld [vmem:[%s220 + $0x7b8] sm:$0xff]
        %v480 = vld [vmem:[%s220 + $0x7c0] sm:$0xff]
        %v481 = vld [vmem:[%s220 + $0x7c8] sm:$0xff]
        %v482 = vld [vmem:[%s220 + $0x7d0] sm:$0xff]
        %v483 = vld [vmem:[%s220 + $0x7d8] sm:$0xff]
        %v484 = vld [vmem:[%s220 + $0x7e0] sm:$0xff]
        %v485 = vld [vmem:[%s220 + $0x7e8] sm:$0xff]
        %v486 = vld [vmem:[%s220 + $0x7f0] sm:$0xff]
        %v487 = vld [vmem:[%s220 + $0x7f8] sm:$0xff]
        %v488 = vld [vmem:[%s220 + $0x800] sm:$0xff]
        %v489 = vld [vmem:[%s220 + $0x808] sm:$0xff]
        %v490 = vld [vmem:[%s220 + $0x810] sm:$0xff]
        %v491 = vld [vmem:[%s220 + $0x818] sm:$0xff]
        %v492 = vld [vmem:[%s220 + $0x820] sm:$0xff]
        %v493 = vld [vmem:[%s220 + $0x828] sm:$0xff]
        %v494 = vld [vmem:[%s220 + $0x830] sm:$0xff]
        %v495 = vld [vmem:[%s220 + $0x838] sm:$0xff]
        %v496 = vld [vmem:[%s220 + $0x840] sm:$0xff]
        %v497 = vld [vmem:[%s220 + $0x848] sm:$0xff]
        %v498 = vld [vmem:[%s220 + $0x850] sm:$0xff]
        %v499 = vld [vmem:[%s220 + $0x858] sm:$0xff]
        %v500 = vld [vmem:[%s220 + $0x860] sm:$0xff]
        %v501 = vld [vmem:[%s220 + $0x868] sm:$0xff]
        %v502 = vld [vmem:[%s220 + $0x870] sm:$0xff]
        %v503 = vld [vmem:[%s220 + $0x878] sm:$0xff]
        %v504 = vld [vmem:[%s220 + $0x880] sm:$0xff]
        %v505 = vld [vmem:[%s220 + $0x888] sm:$0xff]
        %v506 = vld [vmem:[%s220 + $0x890] sm:$0xff]
        %v507 = vld [vmem:[%s220 + $0x898] sm:$0xff]
        %v508 = vld [vmem:[%s220 + $0x8a0] sm:$0xff]
        %v509 = vld [vmem:[%s220 + $0x8a8] sm:$0xff]
        %v510 = vld [vmem:[%s220 + $0x8b0] sm:$0xff]
        %v511 = vld [vmem:[%s220 + $0x8b8] sm:$0xff]
        %v512 = vld [vmem:[%s220 + $0x8c0] sm:$0xff]
        %v513 = vld [vmem:[%s220 + $0x8c8] sm:$0xff]
        %v514 = vld [vmem:[%s220 + $0x8d0] sm:$0xff]
        %v515 = vld [vmem:[%s220 + $0x8d8] sm:$0xff]
        %v516 = vld [vmem:[%s220 + $0x8e0] sm:$0xff]
        %v517 = vld [vmem:[%s220 + $0x8e8] sm:$0xff]
        %v518 = vld [vmem:[%s220 + $0x8f0] sm:$0xff]
        %v519 = vld [vmem:[%s220 + $0x8f8] sm:$0xff]
        %v520 = vld [vmem:[%s220 + $0x900] sm:$0xff]
        %v521 = vld [vmem:[%s220 + $0x908] sm:$0xff]
        %v522 = vld [vmem:[%s220 + $0x910] sm:$0xff]
        %v523 = vld [vmem:[%s220 + $0x918] sm:$0xff]
        %v524 = vld [vmem:[%s220 + $0x920] sm:$0xff]
        %v525 = vld [vmem:[%s220 + $0x928] sm:$0xff]
        %v526 = vld [vmem:[%s220 + $0x930] sm:$0xff]
        %v527 = vld [vmem:[%s220 + $0x938] sm:$0xff]
        %v528 = vld [vmem:[%s220 + $0x940] sm:$0xff]
        %v529 = vld [vmem:[%s220 + $0x948] sm:$0xff]
        %v530 = vld [vmem:[%s220 + $0x950] sm:$0xff]
        %v531 = vld [vmem:[%s220 + $0x958] sm:$0xff]
        %v532 = vld [vmem:[%s220 + $0x960] sm:$0xff]
        %v533 = vld [vmem:[%s220 + $0x968] sm:$0xff]
        %v534 = vld [vmem:[%s220 + $0x970] sm:$0xff]
        %v535 = vld [vmem:[%s220 + $0x978] sm:$0xff]
        %v536 = vld [vmem:[%s220 + $0x980] sm:$0xff]
        %v537 = vld [vmem:[%s220 + $0x988] sm:$0xff]
        %v538 = vld [vmem:[%s220 + $0x990] sm:$0xff]
        %v539 = vld [vmem:[%s220 + $0x998] sm:$0xff]
        %v540 = vld [vmem:[%s220 + $0x9a0] sm:$0xff]
        %v541 = vld [vmem:[%s220 + $0x9a8] sm:$0xff]
        %v542 = vld [vmem:[%s220 + $0x9b0] sm:$0xff]
        %v543 = vld [vmem:[%s220 + $0x9b8] sm:$0xff]
        %v544 = vld [vmem:[%s220 + $0x9c0] sm:$0xff]
        %v545 = vld [vmem:[%s220 + $0x9c8] sm:$0xff]
        %v546 = vld [vmem:[%s220 + $0x9d0] sm:$0xff]
        %v547 = vld [vmem:[%s220 + $0x9d8] sm:$0xff]
        %v548 = vld [vmem:[%s220 + $0x9e0] sm:$0xff]
        %v549 = vld [vmem:[%s220 + $0x9e8] sm:$0xff]
        %v550 = vld [vmem:[%s220 + $0x9f0] sm:$0xff]
        %v551 = vld [vmem:[%s220 + $0x9f8] sm:$0xff]
        %v552 = vld [vmem:[%s220 + $0xa00] sm:$0xff]
        %v553 = vld [vmem:[%s220 + $0xa08] sm:$0xff]
        %v554 = vld [vmem:[%s220 + $0xa10] sm:$0xff]
        %v555 = vld [vmem:[%s220 + $0xa18] sm:$0xff]
        %v556 = vld [vmem:[%s220 + $0xa20] sm:$0xff]
        %v557 = vld [vmem:[%s220 + $0xa28] sm:$0xff]
        %v558 = vld [vmem:[%s220 + $0xa30] sm:$0xff]
        %v559 = vld [vmem:[%s220 + $0xa38] sm:$0xff]
        %v560 = vld [vmem:[%s220 + $0xa40] sm:$0xff]
        %v561 = vld [vmem:[%s220 + $0xa48] sm:$0xff]
        %v562 = vld [vmem:[%s220 + $0xa50] sm:$0xff]
        %v563 = vld [vmem:[%s220 + $0xa58] sm:$0xff]
        %v564 = vld [vmem:[%s220 + $0xa60] sm:$0xff]
        %v565 = vld [vmem:[%s220 + $0xa68] sm:$0xff]
        %v566 = vld [vmem:[%s220 + $0xa70] sm:$0xff]
        %v567 = vld [vmem:[%s220 + $0xa78] sm:$0xff]
        %v568 = vld [vmem:[%s220 + $0xa80] sm:$0xff]
        %v569 = vld [vmem:[%s220 + $0xa88] sm:$0xff]
        %v570 = vld [vmem:[%s220 + $0xa90] sm:$0xff]
        %v571 = vld [vmem:[%s220 + $0xa98] sm:$0xff]
        %v572 = vld [vmem:[%s220 + $0xaa0] sm:$0xff]
        %v573 = vld [vmem:[%s220 + $0xaa8] sm:$0xff]
        %v574 = vld [vmem:[%s220 + $0xab0] sm:$0xff]
        %v575 = vld [vmem:[%s220 + $0xab8] sm:$0xff]
        %v576 = vld [vmem:[%s220 + $0xac0] sm:$0xff]
        %v577 = vld [vmem:[%s220 + $0xac8] sm:$0xff]
        %v578 = vld [vmem:[%s220 + $0xad0] sm:$0xff]
        %v579 = vld [vmem:[%s220 + $0xad8] sm:$0xff]
        %v580 = vld [vmem:[%s220 + $0xae0] sm:$0xff]
        %v581 = vld [vmem:[%s220 + $0xae8] sm:$0xff]
        %v582 = vld [vmem:[%s220 + $0xaf0] sm:$0xff]
        %v583 = vld [vmem:[%s220 + $0xaf8] sm:$0xff]
        %v584 = vld [vmem:[%s220 + $0xb00] sm:$0xff]
        %v585 = vld [vmem:[%s220 + $0xb08] sm:$0xff]
        %v586 = vld [vmem:[%s220 + $0xb10] sm:$0xff]
        %v587 = vld [vmem:[%s220 + $0xb18] sm:$0xff]
        %v588 = vld [vmem:[%s220 + $0xb20] sm:$0xff]
        %v589 = vld [vmem:[%s220 + $0xb28] sm:$0xff]
        %v590 = vld [vmem:[%s220 + $0xb30] sm:$0xff]
        %v591 = vld [vmem:[%s220 + $0xb38] sm:$0xff]
        %v592 = vld [vmem:[%s220 + $0xb40] sm:$0xff]
        %v593 = vld [vmem:[%s220 + $0xb48] sm:$0xff]
        %v594 = vld [vmem:[%s220 + $0xb50] sm:$0xff]
        %v595 = vld [vmem:[%s220 + $0xb58] sm:$0xff]
        %v596 = vld [vmem:[%s220 + $0xb60] sm:$0xff]
        %v597 = vld [vmem:[%s220 + $0xb68] sm:$0xff]
        %v598 = vld [vmem:[%s220 + $0xb70] sm:$0xff]
        %v599 = vld [vmem:[%s220 + $0xb78] sm:$0xff]
        %v600 = vld [vmem:[%s220 + $0xb80] sm:$0xff]
        %v601 = vld [vmem:[%s220 + $0xb88] sm:$0xff]
        %v602 = vld [vmem:[%s220 + $0xb90] sm:$0xff]
        %v603 = vld [vmem:[%s220 + $0xb98] sm:$0xff]
        %v604 = vld [vmem:[%s220 + $0xba0] sm:$0xff]
        %v605 = vld [vmem:[%s220 + $0xba8] sm:$0xff]
        %v606 = vld [vmem:[%s220 + $0xbb0] sm:$0xff]
        %v607 = vld [vmem:[%s220 + $0xbb8] sm:$0xff]
        %v608 = vld [vmem:[%s220 + $0xbc0] sm:$0xff]
        %v609 = vld [vmem:[%s220 + $0xbc8] sm:$0xff]
        %v610 = vld [vmem:[%s220 + $0xbd0] sm:$0xff]
        %v611 = vld [vmem:[%s220 + $0xbd8] sm:$0xff]
        %v612 = vld [vmem:[%s220 + $0xbe0] sm:$0xff]
        %v613 = vld [vmem:[%s220 + $0xbe8] sm:$0xff]
        %v614 = vld [vmem:[%s220 + $0xbf0] sm:$0xff]
        %v615 = vld [vmem:[%s220 + $0xbf8] sm:$0xff]
        %v616 = vld [vmem:[%s220 + $0xc00] sm:$0xff]
        %v617 = vld [vmem:[%s220 + $0xc08] sm:$0xff]
        %v618 = vld [vmem:[%s220 + $0xc10] sm:$0xff]
        %v619 = vld [vmem:[%s220 + $0xc18] sm:$0xff]
        %v620 = vld [vmem:[%s220 + $0xc20] sm:$0xff]
        %v621 = vld [vmem:[%s220 + $0xc28] sm:$0xff]
        %v622 = vld [vmem:[%s220 + $0xc30] sm:$0xff]
        %v623 = vld [vmem:[%s220 + $0xc38] sm:$0xff]
        %v624 = vld [vmem:[%s220 + $0xc40] sm:$0xff]
        %v625 = vld [vmem:[%s220 + $0xc48] sm:$0xff]
        %v626 = vld [vmem:[%s220 + $0xc50] sm:$0xff]
        %v627 = vld [vmem:[%s220 + $0xc58] sm:$0xff]
        %v628 = vld [vmem:[%s220 + $0xc60] sm:$0xff]
        %v629 = vld [vmem:[%s220 + $0xc68] sm:$0xff]
        %v630 = vld [vmem:[%s220 + $0xc70] sm:$0xff]
        %v631 = vld [vmem:[%s220 + $0xc78] sm:$0xff]
        %v632 = vld [vmem:[%s220 + $0xc80] sm:$0xff]
        %v633 = vld [vmem:[%s220 + $0xc88] sm:$0xff]
        %v634 = vld [vmem:[%s220 + $0xc90] sm:$0xff]
        %v635 = vld [vmem:[%s220 + $0xc98] sm:$0xff]
        %v636 = vld [vmem:[%s220 + $0xca0] sm:$0xff]
        %v637 = vld [vmem:[%s220 + $0xca8] sm:$0xff]
        %v638 = vld [vmem:[%s220 + $0xcb0] sm:$0xff]
        %v639 = vld [vmem:[%s220 + $0xcb8] sm:$0xff]
        %v640 = vld [vmem:[%s220 + $0xcc0] sm:$0xff]
        %v641 = vld [vmem:[%s220 + $0xcc8] sm:$0xff]
        %v642 = vld [vmem:[%s220 + $0xcd0] sm:$0xff]
        %v643 = vld [vmem:[%s220 + $0xcd8] sm:$0xff]
        %v644 = vld [vmem:[%s220 + $0xce0] sm:$0xff]
        %v645 = vld [vmem:[%s220 + $0xce8] sm:$0xff]
        %v646 = vld [vmem:[%s220 + $0xcf0] sm:$0xff]
        %v647 = vld [vmem:[%s220 + $0xcf8] sm:$0xff]
        %v648 = vld [vmem:[%s220 + $0xd00] sm:$0xff]
        %v649 = vld [vmem:[%s220 + $0xd08] sm:$0xff]
        %v650 = vld [vmem:[%s220 + $0xd10] sm:$0xff]
        %v651 = vld [vmem:[%s220 + $0xd18] sm:$0xff]
        %v652 = vld [vmem:[%s220 + $0xd20] sm:$0xff]
        %v653 = vld [vmem:[%s220 + $0xd28] sm:$0xff]
        %v654 = vld [vmem:[%s220 + $0xd30] sm:$0xff]
        %v655 = vld [vmem:[%s220 + $0xd38] sm:$0xff]
        %v656 = vld [vmem:[%s220 + $0xd40] sm:$0xff]
        %v657 = vld [vmem:[%s220 + $0xd48] sm:$0xff]
        %v658 = vld [vmem:[%s220 + $0xd50] sm:$0xff]
        %v659 = vld [vmem:[%s220 + $0xd58] sm:$0xff]
        %v660 = vld [vmem:[%s220 + $0xd60] sm:$0xff]
        %v661 = vld [vmem:[%s220 + $0xd68] sm:$0xff]
        %v662 = vld [vmem:[%s220 + $0xd70] sm:$0xff]
        %v663 = vld [vmem:[%s220 + $0xd78] sm:$0xff]
        %v664 = vld [vmem:[%s220 + $0xd80] sm:$0xff]
        %v665 = vld [vmem:[%s220 + $0xd88] sm:$0xff]
        %v666 = vld [vmem:[%s220 + $0xd90] sm:$0xff]
        %v667 = vld [vmem:[%s220 + $0xd98] sm:$0xff]
        %v668 = vld [vmem:[%s220 + $0xda0] sm:$0xff]
        %v669 = vld [vmem:[%s220 + $0xda8] sm:$0xff]
        %v670 = vld [vmem:[%s220 + $0xdb0] sm:$0xff]
        %v671 = vld [vmem:[%s220 + $0xdb8] sm:$0xff]
        %v672 = vld [vmem:[%s220 + $0xdc0] sm:$0xff]
        %v673 = vld [vmem:[%s220 + $0xdc8] sm:$0xff]
        %v674 = vld [vmem:[%s220 + $0xdd0] sm:$0xff]
        %v675 = vld [vmem:[%s220 + $0xdd8] sm:$0xff]
        %v676 = vld [vmem:[%s220 + $0xde0] sm:$0xff]
        %v677 = vld [vmem:[%s220 + $0xde8] sm:$0xff]
        %v678 = vld [vmem:[%s220 + $0xdf0] sm:$0xff]
        %v679 = vld [vmem:[%s220 + $0xdf8] sm:$0xff]
        %v680 = vld [vmem:[%s220 + $0xe00] sm:$0xff]
        %v681 = vld [vmem:[%s220 + $0xe08] sm:$0xff]
        %v682 = vld [vmem:[%s220 + $0xe10] sm:$0xff]
        %v683 = vld [vmem:[%s220 + $0xe18] sm:$0xff]
        %v684 = vld [vmem:[%s220 + $0xe20] sm:$0xff]
        %v685 = vld [vmem:[%s220 + $0xe28] sm:$0xff]
        %v686 = vld [vmem:[%s220 + $0xe30] sm:$0xff]
        %v687 = vld [vmem:[%s220 + $0xe38] sm:$0xff]
        %v688 = vld [vmem:[%s220 + $0xe40] sm:$0xff]
        %v689 = vld [vmem:[%s220 + $0xe48] sm:$0xff]
        %v690 = vld [vmem:[%s220 + $0xe50] sm:$0xff]
        %v691 = vld [vmem:[%s220 + $0xe58] sm:$0xff]
        %v692 = vld [vmem:[%s220 + $0xe60] sm:$0xff]
        %v693 = vld [vmem:[%s220 + $0xe68] sm:$0xff]
        %v694 = vld [vmem:[%s220 + $0xe70] sm:$0xff]
        %v695 = vld [vmem:[%s220 + $0xe78] sm:$0xff]
        %v696 = vld [vmem:[%s220 + $0xe80] sm:$0xff]
        %v697 = vld [vmem:[%s220 + $0xe88] sm:$0xff]
        %v698 = vld [vmem:[%s220 + $0xe90] sm:$0xff]
        %v699 = vld [vmem:[%s220 + $0xe98] sm:$0xff]
        %v700 = vld [vmem:[%s220 + $0xea0] sm:$0xff]
        %v701 = vld [vmem:[%s220 + $0xea8] sm:$0xff]
        %v702 = vld [vmem:[%s220 + $0xeb0] sm:$0xff]
        %v703 = vld [vmem:[%s220 + $0xeb8] sm:$0xff]
        %v704 = vld [vmem:[%s220 + $0xec0] sm:$0xff]
        %v705 = vld [vmem:[%s220 + $0xec8] sm:$0xff]
        %v706 = vld [vmem:[%s220 + $0xed0] sm:$0xff]
        %v707 = vld [vmem:[%s220 + $0xed8] sm:$0xff]
        %v708 = vld [vmem:[%s220 + $0xee0] sm:$0xff]
        %v709 = vld [vmem:[%s220 + $0xee8] sm:$0xff]
        %v710 = vld [vmem:[%s220 + $0xef0] sm:$0xff]
        %v711 = vld [vmem:[%s220 + $0xef8] sm:$0xff]
        %v712 = vld [vmem:[%s220 + $0xf00] sm:$0xff]
        %v713 = vld [vmem:[%s220 + $0xf08] sm:$0xff]
        %v714 = vld [vmem:[%s220 + $0xf10] sm:$0xff]
        %v715 = vld [vmem:[%s220 + $0xf18] sm:$0xff]
        %v716 = vld [vmem:[%s220 + $0xf20] sm:$0xff]
        %v717 = vld [vmem:[%s220 + $0xf28] sm:$0xff]
        %v718 = vld [vmem:[%s220 + $0xf30] sm:$0xff]
        %v719 = vld [vmem:[%s220 + $0xf38] sm:$0xff]
        %v720 = vld [vmem:[%s220 + $0xf40] sm:$0xff]
        %v721 = vld [vmem:[%s220 + $0xf48] sm:$0xff]
        %v722 = vld [vmem:[%s220 + $0xf50] sm:$0xff]
        %v723 = vld [vmem:[%s220 + $0xf58] sm:$0xff]
        %v724 = vld [vmem:[%s220 + $0xf60] sm:$0xff]
        %v725 = vld [vmem:[%s220 + $0xf68] sm:$0xff]
        %v726 = vld [vmem:[%s220 + $0xf70] sm:$0xff]
        %v727 = vld [vmem:[%s220 + $0xf78] sm:$0xff]
        %v728 = vld [vmem:[%s220 + $0xf80] sm:$0xff]
        %v729 = vld [vmem:[%s220 + $0xf88] sm:$0xff]
        %v730 = vld [vmem:[%s220 + $0xf90] sm:$0xff]
        %v731 = vld [vmem:[%s220 + $0xf98] sm:$0xff]
        %v732 = vld [vmem:[%s220 + $0xfa0] sm:$0xff]
        %v733 = vld [vmem:[%s220 + $0xfa8] sm:$0xff]
        %v734 = vld [vmem:[%s220 + $0xfb0] sm:$0xff]
        %v735 = vld [vmem:[%s220 + $0xfb8] sm:$0xff]
        %v736 = vld [vmem:[%s220 + $0xfc0] sm:$0xff]
        %v737 = vld [vmem:[%s220 + $0xfc8] sm:$0xff]
        %v738 = vld [vmem:[%s220 + $0xfd0] sm:$0xff]
        %v739 = vld [vmem:[%s220 + $0xfd8] sm:$0xff]
        %v740 = vld [vmem:[%s220 + $0xfe0] sm:$0xff]
        %v741 = vld [vmem:[%s220 + $0xfe8] sm:$0xff]
        %v742 = vld [vmem:[%s220 + $0xff0] sm:$0xff]
        %v743 = vld [vmem:[%s220 + $0xff8] sm:$0xff]
        %v744 = vld [vmem:[%s225] sm:$0xff]
        %v746 = vlaneseq
        %v747 = vshrl.u32 %v746, 7
        %v748 = vsub.s32 0, %v747
        %v749 = vrot.slane %v744, %v748
        %v750 = vlaneseq
        %v751 = vshrl.u32 %v750, 7
        %v752 = vsub.s32 1, %v751
        %v753 = vrot.slane %v744, %v752
        %v754 = vlaneseq
        %v755 = vshrl.u32 %v754, 7
        %v756 = vsub.s32 2, %v755
        %v757 = vrot.slane %v744, %v756
        %v758 = vlaneseq
        %v759 = vshrl.u32 %v758, 7
        %v760 = vsub.s32 3, %v759
        %v761 = vrot.slane %v744, %v760
        %v762 = vlaneseq
        %v763 = vshrl.u32 %v762, 7
        %v764 = vsub.s32 4, %v763
        %v765 = vrot.slane %v744, %v764
        %v766 = vlaneseq
        %v767 = vshrl.u32 %v766, 7
        %v768 = vsub.s32 5, %v767
        %v769 = vrot.slane %v744, %v768
        %v770 = vlaneseq
        %v771 = vshrl.u32 %v770, 7
        %v772 = vsub.s32 6, %v771
        %v773 = vrot.slane %v744, %v772
        %v774 = vlaneseq
        %v775 = vshrl.u32 %v774, 7
        %v776 = vsub.s32 7, %v775
        %v777 = vrot.slane %v744, %v776
        %786 = vmatprep.subr.mxu0 %v233
        %787 = vmatpush1.xpose.msra.mxu0 %v232
        %788 = vmatprep.subr.mxu0 %v237
        %789 = vmatpush1.xpose.msra.mxu0 %v236
        %790 = vmatprep.subr.mxu0 %v241
        %791 = vmatpush1.xpose.msra.mxu0 %v240
        %792 = vmatprep.subr.mxu0 %v245
        %793 = vmatpush1.xpose.msra.mxu0 %v244
        %794 = vmatprep.subr.mxu0 %v249
        %795 = vmatpush1.xpose.msra.mxu0 %v248
        %796 = vmatprep.subr.mxu0 %v253
        %797 = vmatpush1.xpose.msra.mxu0 %v252
        %798 = vmatprep.subr.mxu0 %v257
        %799 = vmatpush1.xpose.msra.mxu0 %v256
        %800 = vmatprep.subr.mxu0 %v261
        %801 = vmatpush1.xpose.msra.mxu0 %v260
        %802 = vmatprep.subr.mxu0 %v265
        %803 = vmatpush1.xpose.msra.mxu0 %v264
        %804 = vmatprep.subr.mxu0 %v269
        %805 = vmatpush1.xpose.msra.mxu0 %v268
        %806 = vmatprep.subr.mxu0 %v273
        %807 = vmatpush1.xpose.msra.mxu0 %v272
        %808 = vmatprep.subr.mxu0 %v277
        %809 = vmatpush1.xpose.msra.mxu0 %v276
        %810 = vmatprep.subr.mxu0 %v281
        %811 = vmatpush1.xpose.msra.mxu0 %v280
        %812 = vmatprep.subr.mxu0 %v285
        %813 = vmatpush1.xpose.msra.mxu0 %v284
        %814 = vmatprep.subr.mxu0 %v289
        %815 = vmatpush1.xpose.msra.mxu0 %v288
        %816 = vmatprep.subr.mxu0 %v293
        %817 = vmatpush1.xpose.msra.mxu0 %v292
        %818 = vmatprep.subr.mxu0 %v297
        %819 = vmatpush1.xpose.msra.mxu0 %v296
        %820 = vmatprep.subr.mxu0 %v301
        %821 = vmatpush1.xpose.msra.mxu0 %v300
        %822 = vmatprep.subr.mxu0 %v305
        %823 = vmatpush1.xpose.msra.mxu0 %v304
        %824 = vmatprep.subr.mxu0 %v309
        %825 = vmatpush1.xpose.msra.mxu0 %v308
        %826 = vmatprep.subr.mxu0 %v313
        %827 = vmatpush1.xpose.msra.mxu0 %v312
        %828 = vmatprep.subr.mxu0 %v317
        %829 = vmatpush1.xpose.msra.mxu0 %v316
        %830 = vmatprep.subr.mxu0 %v321
        %831 = vmatpush1.xpose.msra.mxu0 %v320
        %832 = vmatprep.subr.mxu0 %v325
        %833 = vmatpush1.xpose.msra.mxu0 %v324
        %834 = vmatprep.subr.mxu0 %v329
        %835 = vmatpush1.xpose.msra.mxu0 %v328
        %836 = vmatprep.subr.mxu0 %v333
        %837 = vmatpush1.xpose.msra.mxu0 %v332
        %838 = vmatprep.subr.mxu0 %v337
        %839 = vmatpush1.xpose.msra.mxu0 %v336
        %840 = vmatprep.subr.mxu0 %v341
        %841 = vmatpush1.xpose.msra.mxu0 %v340
        %842 = vmatprep.subr.mxu0 %v345
        %843 = vmatpush1.xpose.msra.mxu0 %v344
        %844 = vmatprep.subr.mxu0 %v349
        %845 = vmatpush1.xpose.msra.mxu0 %v348
        %846 = vmatprep.subr.mxu0 %v353
        %847 = vmatpush1.xpose.msra.mxu0 %v352
        %848 = vmatprep.subr.mxu0 %v357
        %849 = vmatpush1.xpose.msra.mxu0 %v356
        %850 = vmatprep.mubr.f32.mxu0 %v229
        %851 = vmatmul.mubr.f32.gmra.mrb[0].mxu0 %v228
        %v852 = vpop.f32.mrb[0].mxu0
        %v853 = vadd.f32 %v749, %v852
        %v854 = vpop.f32.mrb[0].mxu0
        %v855 = vadd.f32 %v753, %v854
        %856 = vdwg.mxu0
        %857 = vmatprep.subr.mxu0 %v235
        %858 = vmatpush1.xpose.msra.mxu0 %v234
        %859 = vmatprep.subr.mxu0 %v239
        %860 = vmatpush1.xpose.msra.mxu0 %v238
        %861 = vmatprep.subr.mxu0 %v243
        %862 = vmatpush1.xpose.msra.mxu0 %v242
        %863 = vmatprep.subr.mxu0 %v247
        %864 = vmatpush1.xpose.msra.mxu0 %v246
        %865 = vmatprep.subr.mxu0 %v251
        %866 = vmatpush1.xpose.msra.mxu0 %v250
        %867 = vmatprep.subr.mxu0 %v255
        %868 = vmatpush1.xpose.msra.mxu0 %v254
        %869 = vmatprep.subr.mxu0 %v259
        %870 = vmatpush1.xpose.msra.mxu0 %v258
        %871 = vmatprep.subr.mxu0 %v263
        %872 = vmatpush1.xpose.msra.mxu0 %v262
        %873 = vmatprep.subr.mxu0 %v267
        %874 = vmatpush1.xpose.msra.mxu0 %v266
        %875 = vmatprep.subr.mxu0 %v271
        %876 = vmatpush1.xpose.msra.mxu0 %v270
        %877 = vmatprep.subr.mxu0 %v275
        %878 = vmatpush1.xpose.msra.mxu0 %v274
        %879 = vmatprep.subr.mxu0 %v279
        %880 = vmatpush1.xpose.msra.mxu0 %v278
        %881 = vmatprep.subr.mxu0 %v283
        %882 = vmatpush1.xpose.msra.mxu0 %v282
        %883 = vmatprep.subr.mxu0 %v287
        %884 = vmatpush1.xpose.msra.mxu0 %v286
        %885 = vmatprep.subr.mxu0 %v291
        %886 = vmatpush1.xpose.msra.mxu0 %v290
        %887 = vmatprep.subr.mxu0 %v295
        %888 = vmatpush1.xpose.msra.mxu0 %v294
        %889 = vmatprep.subr.mxu0 %v299
        %890 = vmatpush1.xpose.msra.mxu0 %v298
        %891 = vmatprep.subr.mxu0 %v303
        %892 = vmatpush1.xpose.msra.mxu0 %v302
        %893 = vmatprep.subr.mxu0 %v307
        %894 = vmatpush1.xpose.msra.mxu0 %v306
        %895 = vmatprep.subr.mxu0 %v311
        %896 = vmatpush1.xpose.msra.mxu0 %v310
        %897 = vmatprep.subr.mxu0 %v315
        %898 = vmatpush1.xpose.msra.mxu0 %v314
        %899 = vmatprep.subr.mxu0 %v319
        %900 = vmatpush1.xpose.msra.mxu0 %v318
        %901 = vmatprep.subr.mxu0 %v323
        %902 = vmatpush1.xpose.msra.mxu0 %v322
        %903 = vmatprep.subr.mxu0 %v327
        %904 = vmatpush1.xpose.msra.mxu0 %v326
        %905 = vmatprep.subr.mxu0 %v331
        %906 = vmatpush1.xpose.msra.mxu0 %v330
        %907 = vmatprep.subr.mxu0 %v335
        %908 = vmatpush1.xpose.msra.mxu0 %v334
        %909 = vmatprep.subr.mxu0 %v339
        %910 = vmatpush1.xpose.msra.mxu0 %v338
        %911 = vmatprep.subr.mxu0 %v343
        %912 = vmatpush1.xpose.msra.mxu0 %v342
        %913 = vmatprep.subr.mxu0 %v347
        %914 = vmatpush1.xpose.msra.mxu0 %v346
        %915 = vmatprep.subr.mxu0 %v351
        %916 = vmatpush1.xpose.msra.mxu0 %v350
        %917 = vmatprep.subr.mxu0 %v355
        %918 = vmatpush1.xpose.msra.mxu0 %v354
        %919 = vmatprep.subr.mxu0 %v359
        %920 = vmatpush1.xpose.msra.mxu0 %v358
        %921 = vmatprep.mubr.f32.mxu0 %v231
        %922 = vmatmul.mubr.f32.gmra.mrb[0].mxu0 %v230
        %v923 = vpop.f32.mrb[0].mxu0
        %v924 = vadd.f32 %v853, %v923
        %v925 = vpop.f32.mrb[0].mxu0
        %v926 = vadd.f32 %v855, %v925
        %927 = vdwg.mxu0
        %928 = vmatprep.subr.mxu0 %v361
        %929 = vmatpush1.xpose.msra.mxu0 %v360
        %930 = vmatprep.subr.mxu0 %v365
        %931 = vmatpush1.xpose.msra.mxu0 %v364
        %932 = vmatprep.subr.mxu0 %v369
        %933 = vmatpush1.xpose.msra.mxu0 %v368
        %934 = vmatprep.subr.mxu0 %v373
        %935 = vmatpush1.xpose.msra.mxu0 %v372
        %936 = vmatprep.subr.mxu0 %v377
        %937 = vmatpush1.xpose.msra.mxu0 %v376
        %938 = vmatprep.subr.mxu0 %v381
        %939 = vmatpush1.xpose.msra.mxu0 %v380
        %940 = vmatprep.subr.mxu0 %v385
        %941 = vmatpush1.xpose.msra.mxu0 %v384
        %942 = vmatprep.subr.mxu0 %v389
        %943 = vmatpush1.xpose.msra.mxu0 %v388
        %944 = vmatprep.subr.mxu0 %v393
        %945 = vmatpush1.xpose.msra.mxu0 %v392
        %946 = vmatprep.subr.mxu0 %v397
        %947 = vmatpush1.xpose.msra.mxu0 %v396
        %948 = vmatprep.subr.mxu0 %v401
        %949 = vmatpush1.xpose.msra.mxu0 %v400
        %950 = vmatprep.subr.mxu0 %v405
        %951 = vmatpush1.xpose.msra.mxu0 %v404
        %952 = vmatprep.subr.mxu0 %v409
        %953 = vmatpush1.xpose.msra.mxu0 %v408
        %954 = vmatprep.subr.mxu0 %v413
        %955 = vmatpush1.xpose.msra.mxu0 %v412
        %956 = vmatprep.subr.mxu0 %v417
        %957 = vmatpush1.xpose.msra.mxu0 %v416
        %958 = vmatprep.subr.mxu0 %v421
        %959 = vmatpush1.xpose.msra.mxu0 %v420
        %960 = vmatprep.subr.mxu0 %v425
        %961 = vmatpush1.xpose.msra.mxu0 %v424
        %962 = vmatprep.subr.mxu0 %v429
        %963 = vmatpush1.xpose.msra.mxu0 %v428
        %964 = vmatprep.subr.mxu0 %v433
        %965 = vmatpush1.xpose.msra.mxu0 %v432
        %966 = vmatprep.subr.mxu0 %v437
        %967 = vmatpush1.xpose.msra.mxu0 %v436
        %968 = vmatprep.subr.mxu0 %v441
        %969 = vmatpush1.xpose.msra.mxu0 %v440
        %970 = vmatprep.subr.mxu0 %v445
        %971 = vmatpush1.xpose.msra.mxu0 %v444
        %972 = vmatprep.subr.mxu0 %v449
        %973 = vmatpush1.xpose.msra.mxu0 %v448
        %974 = vmatprep.subr.mxu0 %v453
        %975 = vmatpush1.xpose.msra.mxu0 %v452
        %976 = vmatprep.subr.mxu0 %v457
        %977 = vmatpush1.xpose.msra.mxu0 %v456
        %978 = vmatprep.subr.mxu0 %v461
        %979 = vmatpush1.xpose.msra.mxu0 %v460
        %980 = vmatprep.subr.mxu0 %v465
        %981 = vmatpush1.xpose.msra.mxu0 %v464
        %982 = vmatprep.subr.mxu0 %v469
        %983 = vmatpush1.xpose.msra.mxu0 %v468
        %984 = vmatprep.subr.mxu0 %v473
        %985 = vmatpush1.xpose.msra.mxu0 %v472
        %986 = vmatprep.subr.mxu0 %v477
        %987 = vmatpush1.xpose.msra.mxu0 %v476
        %988 = vmatprep.subr.mxu0 %v481
        %989 = vmatpush1.xpose.msra.mxu0 %v480
        %990 = vmatprep.subr.mxu0 %v485
        %991 = vmatpush1.xpose.msra.mxu0 %v484
        %992 = vmatprep.mubr.f32.mxu0 %v229
        %993 = vmatmul.mubr.f32.gmra.mrb[0].mxu0 %v228
        %v994 = vpop.f32.mrb[0].mxu0
        %v995 = vadd.f32 %v757, %v994
        %v996 = vpop.f32.mrb[0].mxu0
        %v997 = vadd.f32 %v761, %v996
        %998 = vdwg.mxu0
        %999 = vmatprep.subr.mxu0 %v363
        %1000 = vmatpush1.xpose.msra.mxu0 %v362
        %1001 = vmatprep.subr.mxu0 %v367
        %1002 = vmatpush1.xpose.msra.mxu0 %v366
        %1003 = vmatprep.subr.mxu0 %v371
        %1004 = vmatpush1.xpose.msra.mxu0 %v370
        %1005 = vmatprep.subr.mxu0 %v375
        %1006 = vmatpush1.xpose.msra.mxu0 %v374
        %1007 = vmatprep.subr.mxu0 %v379
        %1008 = vmatpush1.xpose.msra.mxu0 %v378
        %1009 = vmatprep.subr.mxu0 %v383
        %1010 = vmatpush1.xpose.msra.mxu0 %v382
        %1011 = vmatprep.subr.mxu0 %v387
        %1012 = vmatpush1.xpose.msra.mxu0 %v386
        %1013 = vmatprep.subr.mxu0 %v391
        %1014 = vmatpush1.xpose.msra.mxu0 %v390
        %1015 = vmatprep.subr.mxu0 %v395
        %1016 = vmatpush1.xpose.msra.mxu0 %v394
        %1017 = vmatprep.subr.mxu0 %v399
        %1018 = vmatpush1.xpose.msra.mxu0 %v398
        %1019 = vmatprep.subr.mxu0 %v403
        %1020 = vmatpush1.xpose.msra.mxu0 %v402
        %1021 = vmatprep.subr.mxu0 %v407
        %1022 = vmatpush1.xpose.msra.mxu0 %v406
        %1023 = vmatprep.subr.mxu0 %v411
        %1024 = vmatpush1.xpose.msra.mxu0 %v410
        %1025 = vmatprep.subr.mxu0 %v415
        %1026 = vmatpush1.xpose.msra.mxu0 %v414
        %1027 = vmatprep.subr.mxu0 %v419
        %1028 = vmatpush1.xpose.msra.mxu0 %v418
        %1029 = vmatprep.subr.mxu0 %v423
        %1030 = vmatpush1.xpose.msra.mxu0 %v422
        %1031 = vmatprep.subr.mxu0 %v427
        %1032 = vmatpush1.xpose.msra.mxu0 %v426
        %1033 = vmatprep.subr.mxu0 %v431
        %1034 = vmatpush1.xpose.msra.mxu0 %v430
        %1035 = vmatprep.subr.mxu0 %v435
        %1036 = vmatpush1.xpose.msra.mxu0 %v434
        %1037 = vmatprep.subr.mxu0 %v439
        %1038 = vmatpush1.xpose.msra.mxu0 %v438
        %1039 = vmatprep.subr.mxu0 %v443
        %1040 = vmatpush1.xpose.msra.mxu0 %v442
        %1041 = vmatprep.subr.mxu0 %v447
        %1042 = vmatpush1.xpose.msra.mxu0 %v446
        %1043 = vmatprep.subr.mxu0 %v451
        %1044 = vmatpush1.xpose.msra.mxu0 %v450
        %1045 = vmatprep.subr.mxu0 %v455
        %1046 = vmatpush1.xpose.msra.mxu0 %v454
        %1047 = vmatprep.subr.mxu0 %v459
        %1048 = vmatpush1.xpose.msra.mxu0 %v458
        %1049 = vmatprep.subr.mxu0 %v463
        %1050 = vmatpush1.xpose.msra.mxu0 %v462
        %1051 = vmatprep.subr.mxu0 %v467
        %1052 = vmatpush1.xpose.msra.mxu0 %v466
        %1053 = vmatprep.subr.mxu0 %v471
        %1054 = vmatpush1.xpose.msra.mxu0 %v470
        %1055 = vmatprep.subr.mxu0 %v475
        %1056 = vmatpush1.xpose.msra.mxu0 %v474
        %1057 = vmatprep.subr.mxu0 %v479
        %1058 = vmatpush1.xpose.msra.mxu0 %v478
        %1059 = vmatprep.subr.mxu0 %v483
        %1060 = vmatpush1.xpose.msra.mxu0 %v482
        %1061 = vmatprep.subr.mxu0 %v487
        %1062 = vmatpush1.xpose.msra.mxu0 %v486
        %1063 = vmatprep.mubr.f32.mxu0 %v231
        %1064 = vmatmul.mubr.f32.gmra.mrb[0].mxu0 %v230
        %v1065 = vpop.f32.mrb[0].mxu0
        %v1066 = vadd.f32 %v995, %v1065
        %v1067 = vpop.f32.mrb[0].mxu0
        %v1068 = vadd.f32 %v997, %v1067
        %1069 = vdwg.mxu0
        %1070 = vmatprep.subr.mxu0 %v489
        %1071 = vmatpush1.xpose.msra.mxu0 %v488
        %1072 = vmatprep.subr.mxu0 %v493
        %1073 = vmatpush1.xpose.msra.mxu0 %v492
        %1074 = vmatprep.subr.mxu0 %v497
        %1075 = vmatpush1.xpose.msra.mxu0 %v496
        %1076 = vmatprep.subr.mxu0 %v501
        %1077 = vmatpush1.xpose.msra.mxu0 %v500
        %1078 = vmatprep.subr.mxu0 %v505
        %1079 = vmatpush1.xpose.msra.mxu0 %v504
        %1080 = vmatprep.subr.mxu0 %v509
        %1081 = vmatpush1.xpose.msra.mxu0 %v508
        %1082 = vmatprep.subr.mxu0 %v513
        %1083 = vmatpush1.xpose.msra.mxu0 %v512
        %1084 = vmatprep.subr.mxu0 %v517
        %1085 = vmatpush1.xpose.msra.mxu0 %v516
        %1086 = vmatprep.subr.mxu0 %v521
        %1087 = vmatpush1.xpose.msra.mxu0 %v520
        %1088 = vmatprep.subr.mxu0 %v525
        %1089 = vmatpush1.xpose.msra.mxu0 %v524
        %1090 = vmatprep.subr.mxu0 %v529
        %1091 = vmatpush1.xpose.msra.mxu0 %v528
        %1092 = vmatprep.subr.mxu0 %v533
        %1093 = vmatpush1.xpose.msra.mxu0 %v532
        %1094 = vmatprep.subr.mxu0 %v537
        %1095 = vmatpush1.xpose.msra.mxu0 %v536
        %1096 = vmatprep.subr.mxu0 %v541
        %1097 = vmatpush1.xpose.msra.mxu0 %v540
        %1098 = vmatprep.subr.mxu0 %v545
        %1099 = vmatpush1.xpose.msra.mxu0 %v544
        %1100 = vmatprep.subr.mxu0 %v549
        %1101 = vmatpush1.xpose.msra.mxu0 %v548
        %1102 = vmatprep.subr.mxu0 %v553
        %1103 = vmatpush1.xpose.msra.mxu0 %v552
        %1104 = vmatprep.subr.mxu0 %v557
        %1105 = vmatpush1.xpose.msra.mxu0 %v556
        %1106 = vmatprep.subr.mxu0 %v561
        %1107 = vmatpush1.xpose.msra.mxu0 %v560
        %1108 = vmatprep.subr.mxu0 %v565
        %1109 = vmatpush1.xpose.msra.mxu0 %v564
        %1110 = vmatprep.subr.mxu0 %v569
        %1111 = vmatpush1.xpose.msra.mxu0 %v568
        %1112 = vmatprep.subr.mxu0 %v573
        %1113 = vmatpush1.xpose.msra.mxu0 %v572
        %1114 = vmatprep.subr.mxu0 %v577
        %1115 = vmatpush1.xpose.msra.mxu0 %v576
        %1116 = vmatprep.subr.mxu0 %v581
        %1117 = vmatpush1.xpose.msra.mxu0 %v580
        %1118 = vmatprep.subr.mxu0 %v585
        %1119 = vmatpush1.xpose.msra.mxu0 %v584
        %1120 = vmatprep.subr.mxu0 %v589
        %1121 = vmatpush1.xpose.msra.mxu0 %v588
        %1122 = vmatprep.subr.mxu0 %v593
        %1123 = vmatpush1.xpose.msra.mxu0 %v592
        %1124 = vmatprep.subr.mxu0 %v597
        %1125 = vmatpush1.xpose.msra.mxu0 %v596
        %1126 = vmatprep.subr.mxu0 %v601
        %1127 = vmatpush1.xpose.msra.mxu0 %v600
        %1128 = vmatprep.subr.mxu0 %v605
        %1129 = vmatpush1.xpose.msra.mxu0 %v604
        %1130 = vmatprep.subr.mxu0 %v609
        %1131 = vmatpush1.xpose.msra.mxu0 %v608
        %1132 = vmatprep.subr.mxu0 %v613
        %1133 = vmatpush1.xpose.msra.mxu0 %v612
        %1134 = vmatprep.mubr.f32.mxu0 %v229
        %1135 = vmatmul.mubr.f32.gmra.mrb[0].mxu0 %v228
        %v1136 = vpop.f32.mrb[0].mxu0
        %v1137 = vadd.f32 %v765, %v1136
        %v1138 = vpop.f32.mrb[0].mxu0
        %v1139 = vadd.f32 %v769, %v1138
        %1140 = vdwg.mxu0
        %1141 = vmatprep.subr.mxu0 %v491
        %1142 = vmatpush1.xpose.msra.mxu0 %v490
        %1143 = vmatprep.subr.mxu0 %v495
        %1144 = vmatpush1.xpose.msra.mxu0 %v494
        %1145 = vmatprep.subr.mxu0 %v499
        %1146 = vmatpush1.xpose.msra.mxu0 %v498
        %1147 = vmatprep.subr.mxu0 %v503
        %1148 = vmatpush1.xpose.msra.mxu0 %v502
        %1149 = vmatprep.subr.mxu0 %v507
        %1150 = vmatpush1.xpose.msra.mxu0 %v506
        %1151 = vmatprep.subr.mxu0 %v511
        %1152 = vmatpush1.xpose.msra.mxu0 %v510
        %1153 = vmatprep.subr.mxu0 %v515
        %1154 = vmatpush1.xpose.msra.mxu0 %v514
        %1155 = vmatprep.subr.mxu0 %v519
        %1156 = vmatpush1.xpose.msra.mxu0 %v518
        %1157 = vmatprep.subr.mxu0 %v523
        %1158 = vmatpush1.xpose.msra.mxu0 %v522
        %1159 = vmatprep.subr.mxu0 %v527
        %1160 = vmatpush1.xpose.msra.mxu0 %v526
        %1161 = vmatprep.subr.mxu0 %v531
        %1162 = vmatpush1.xpose.msra.mxu0 %v530
        %1163 = vmatprep.subr.mxu0 %v535
        %1164 = vmatpush1.xpose.msra.mxu0 %v534
        %1165 = vmatprep.subr.mxu0 %v539
        %1166 = vmatpush1.xpose.msra.mxu0 %v538
        %1167 = vmatprep.subr.mxu0 %v543
        %1168 = vmatpush1.xpose.msra.mxu0 %v542
        %1169 = vmatprep.subr.mxu0 %v547
        %1170 = vmatpush1.xpose.msra.mxu0 %v546
        %1171 = vmatprep.subr.mxu0 %v551
        %1172 = vmatpush1.xpose.msra.mxu0 %v550
        %1173 = vmatprep.subr.mxu0 %v555
        %1174 = vmatpush1.xpose.msra.mxu0 %v554
        %1175 = vmatprep.subr.mxu0 %v559
        %1176 = vmatpush1.xpose.msra.mxu0 %v558
        %1177 = vmatprep.subr.mxu0 %v563
        %1178 = vmatpush1.xpose.msra.mxu0 %v562
        %1179 = vmatprep.subr.mxu0 %v567
        %1180 = vmatpush1.xpose.msra.mxu0 %v566
        %1181 = vmatprep.subr.mxu0 %v571
        %1182 = vmatpush1.xpose.msra.mxu0 %v570
        %1183 = vmatprep.subr.mxu0 %v575
        %1184 = vmatpush1.xpose.msra.mxu0 %v574
        %1185 = vmatprep.subr.mxu0 %v579
        %1186 = vmatpush1.xpose.msra.mxu0 %v578
        %1187 = vmatprep.subr.mxu0 %v583
        %1188 = vmatpush1.xpose.msra.mxu0 %v582
        %1189 = vmatprep.subr.mxu0 %v587
        %1190 = vmatpush1.xpose.msra.mxu0 %v586
        %1191 = vmatprep.subr.mxu0 %v591
        %1192 = vmatpush1.xpose.msra.mxu0 %v590
        %1193 = vmatprep.subr.mxu0 %v595
        %1194 = vmatpush1.xpose.msra.mxu0 %v594
        %1195 = vmatprep.subr.mxu0 %v599
        %1196 = vmatpush1.xpose.msra.mxu0 %v598
        %1197 = vmatprep.subr.mxu0 %v603
        %1198 = vmatpush1.xpose.msra.mxu0 %v602
        %1199 = vmatprep.subr.mxu0 %v607
        %1200 = vmatpush1.xpose.msra.mxu0 %v606
        %1201 = vmatprep.subr.mxu0 %v611
        %1202 = vmatpush1.xpose.msra.mxu0 %v610
        %1203 = vmatprep.subr.mxu0 %v615
        %1204 = vmatpush1.xpose.msra.mxu0 %v614
        %1205 = vmatprep.mubr.f32.mxu0 %v231
        %1206 = vmatmul.mubr.f32.gmra.mrb[0].mxu0 %v230
        %v1207 = vpop.f32.mrb[0].mxu0
        %v1208 = vadd.f32 %v1137, %v1207
        %v1209 = vpop.f32.mrb[0].mxu0
        %v1210 = vadd.f32 %v1139, %v1209
        %1211 = vdwg.mxu0
        %1212 = vmatprep.subr.mxu0 %v617
        %1213 = vmatpush1.xpose.msra.mxu0 %v616
        %1214 = vmatprep.subr.mxu0 %v621
        %1215 = vmatpush1.xpose.msra.mxu0 %v620
        %1216 = vmatprep.subr.mxu0 %v625
        %1217 = vmatpush1.xpose.msra.mxu0 %v624
        %1218 = vmatprep.subr.mxu0 %v629
        %1219 = vmatpush1.xpose.msra.mxu0 %v628
        %1220 = vmatprep.subr.mxu0 %v633
        %1221 = vmatpush1.xpose.msra.mxu0 %v632
        %1222 = vmatprep.subr.mxu0 %v637
        %1223 = vmatpush1.xpose.msra.mxu0 %v636
        %1224 = vmatprep.subr.mxu0 %v641
        %1225 = vmatpush1.xpose.msra.mxu0 %v640
        %1226 = vmatprep.subr.mxu0 %v645
        %1227 = vmatpush1.xpose.msra.mxu0 %v644
        %1228 = vmatprep.subr.mxu0 %v649
        %1229 = vmatpush1.xpose.msra.mxu0 %v648
        %1230 = vmatprep.subr.mxu0 %v653
        %1231 = vmatpush1.xpose.msra.mxu0 %v652
        %1232 = vmatprep.subr.mxu0 %v657
        %1233 = vmatpush1.xpose.msra.mxu0 %v656
        %1234 = vmatprep.subr.mxu0 %v661
        %1235 = vmatpush1.xpose.msra.mxu0 %v660
        %1236 = vmatprep.subr.mxu0 %v665
        %1237 = vmatpush1.xpose.msra.mxu0 %v664
        %1238 = vmatprep.subr.mxu0 %v669
        %1239 = vmatpush1.xpose.msra.mxu0 %v668
        %1240 = vmatprep.subr.mxu0 %v673
        %1241 = vmatpush1.xpose.msra.mxu0 %v672
        %1242 = vmatprep.subr.mxu0 %v677
        %1243 = vmatpush1.xpose.msra.mxu0 %v676
        %1244 = vmatprep.subr.mxu0 %v681
        %1245 = vmatpush1.xpose.msra.mxu0 %v680
        %1246 = vmatprep.subr.mxu0 %v685
        %1247 = vmatpush1.xpose.msra.mxu0 %v684
        %1248 = vmatprep.subr.mxu0 %v689
        %1249 = vmatpush1.xpose.msra.mxu0 %v688
        %1250 = vmatprep.subr.mxu0 %v693
        %1251 = vmatpush1.xpose.msra.mxu0 %v692
        %1252 = vmatprep.subr.mxu0 %v697
        %1253 = vmatpush1.xpose.msra.mxu0 %v696
        %1254 = vmatprep.subr.mxu0 %v701
        %1255 = vmatpush1.xpose.msra.mxu0 %v700
        %1256 = vmatprep.subr.mxu0 %v705
        %1257 = vmatpush1.xpose.msra.mxu0 %v704
        %1258 = vmatprep.subr.mxu0 %v709
        %1259 = vmatpush1.xpose.msra.mxu0 %v708
        %1260 = vmatprep.subr.mxu0 %v713
        %1261 = vmatpush1.xpose.msra.mxu0 %v712
        %1262 = vmatprep.subr.mxu0 %v717
        %1263 = vmatpush1.xpose.msra.mxu0 %v716
        %1264 = vmatprep.subr.mxu0 %v721
        %1265 = vmatpush1.xpose.msra.mxu0 %v720
        %1266 = vmatprep.subr.mxu0 %v725
        %1267 = vmatpush1.xpose.msra.mxu0 %v724
        %1268 = vmatprep.subr.mxu0 %v729
        %1269 = vmatpush1.xpose.msra.mxu0 %v728
        %1270 = vmatprep.subr.mxu0 %v733
        %1271 = vmatpush1.xpose.msra.mxu0 %v732
        %1272 = vmatprep.subr.mxu0 %v737
        %1273 = vmatpush1.xpose.msra.mxu0 %v736
        %1274 = vmatprep.subr.mxu0 %v741
        %1275 = vmatpush1.xpose.msra.mxu0 %v740
        %1276 = vmatprep.mubr.f32.mxu0 %v229
        %1277 = vmatmul.mubr.f32.gmra.mrb[0].mxu0 %v228
        %v1278 = vpop.f32.mrb[0].mxu0
        %v1279 = vadd.f32 %v773, %v1278
        %v1280 = vpop.f32.mrb[0].mxu0
        %v1281 = vadd.f32 %v777, %v1280
        %1282 = vdwg.mxu0
        %1283 = vmatprep.subr.mxu0 %v619
        %1284 = vmatpush1.xpose.msra.mxu0 %v618
        %1285 = vmatprep.subr.mxu0 %v623
        %1286 = vmatpush1.xpose.msra.mxu0 %v622
        %1287 = vmatprep.subr.mxu0 %v627
        %1288 = vmatpush1.xpose.msra.mxu0 %v626
        %1289 = vmatprep.subr.mxu0 %v631
        %1290 = vmatpush1.xpose.msra.mxu0 %v630
        %1291 = vmatprep.subr.mxu0 %v635
        %1292 = vmatpush1.xpose.msra.mxu0 %v634
        %1293 = vmatprep.subr.mxu0 %v639
        %1294 = vmatpush1.xpose.msra.mxu0 %v638
        %1295 = vmatprep.subr.mxu0 %v643
        %1296 = vmatpush1.xpose.msra.mxu0 %v642
        %1297 = vmatprep.subr.mxu0 %v647
        %1298 = vmatpush1.xpose.msra.mxu0 %v646
        %1299 = vmatprep.subr.mxu0 %v651
        %1300 = vmatpush1.xpose.msra.mxu0 %v650
        %1301 = vmatprep.subr.mxu0 %v655
        %1302 = vmatpush1.xpose.msra.mxu0 %v654
        %1303 = vmatprep.subr.mxu0 %v659
        %1304 = vmatpush1.xpose.msra.mxu0 %v658
        %1305 = vmatprep.subr.mxu0 %v663
        %1306 = vmatpush1.xpose.msra.mxu0 %v662
        %1307 = vmatprep.subr.mxu0 %v667
        %1308 = vmatpush1.xpose.msra.mxu0 %v666
        %1309 = vmatprep.subr.mxu0 %v671
        %1310 = vmatpush1.xpose.msra.mxu0 %v670
        %1311 = vmatprep.subr.mxu0 %v675
        %1312 = vmatpush1.xpose.msra.mxu0 %v674
        %1313 = vmatprep.subr.mxu0 %v679
        %1314 = vmatpush1.xpose.msra.mxu0 %v678
        %1315 = vmatprep.subr.mxu0 %v683
        %1316 = vmatpush1.xpose.msra.mxu0 %v682
        %1317 = vmatprep.subr.mxu0 %v687
        %1318 = vmatpush1.xpose.msra.mxu0 %v686
        %1319 = vmatprep.subr.mxu0 %v691
        %1320 = vmatpush1.xpose.msra.mxu0 %v690
        %1321 = vmatprep.subr.mxu0 %v695
        %1322 = vmatpush1.xpose.msra.mxu0 %v694
        %1323 = vmatprep.subr.mxu0 %v699
        %1324 = vmatpush1.xpose.msra.mxu0 %v698
        %1325 = vmatprep.subr.mxu0 %v703
        %1326 = vmatpush1.xpose.msra.mxu0 %v702
        %1327 = vmatprep.subr.mxu0 %v707
        %1328 = vmatpush1.xpose.msra.mxu0 %v706
        %1329 = vmatprep.subr.mxu0 %v711
        %1330 = vmatpush1.xpose.msra.mxu0 %v710
        %1331 = vmatprep.subr.mxu0 %v715
        %1332 = vmatpush1.xpose.msra.mxu0 %v714
        %1333 = vmatprep.subr.mxu0 %v719
        %1334 = vmatpush1.xpose.msra.mxu0 %v718
        %1335 = vmatprep.subr.mxu0 %v723
        %1336 = vmatpush1.xpose.msra.mxu0 %v722
        %1337 = vmatprep.subr.mxu0 %v727
        %1338 = vmatpush1.xpose.msra.mxu0 %v726
        %1339 = vmatprep.subr.mxu0 %v731
        %1340 = vmatpush1.xpose.msra.mxu0 %v730
        %1341 = vmatprep.subr.mxu0 %v735
        %1342 = vmatpush1.xpose.msra.mxu0 %v734
        %1343 = vmatprep.subr.mxu0 %v739
        %1344 = vmatpush1.xpose.msra.mxu0 %v738
        %1345 = vmatprep.subr.mxu0 %v743
        %1346 = vmatpush1.xpose.msra.mxu0 %v742
        %1347 = vmatprep.mubr.f32.mxu0 %v231
        %1348 = vmatmul.mubr.f32.gmra.mrb[0].mxu0 %v230
        %v1349 = vpop.f32.mrb[0].mxu0
        %v1350 = vadd.f32 %v1279, %v1349
        %v1351 = vpop.f32.mrb[0].mxu0
        %v1352 = vadd.f32 %v1281, %v1351
        %1353 = vdwg.mxu0
        %1354 = vst [vmem:[%s209] sm:$0xff] %v924
        %1355 = vst [vmem:[%s209 + $0x8] sm:$0xff] %v926
        %1356 = vst [vmem:[%s209 + $0x10] sm:$0xff] %v1066
        %1357 = vst [vmem:[%s209 + $0x18] sm:$0xff] %v1068
        %1358 = vst [vmem:[%s209 + $0x20] sm:$0xff] %v1208
        %1359 = vst [vmem:[%s209 + $0x28] sm:$0xff] %v1210
        %1360 = vst [vmem:[%s209 + $0x30] sm:$0xff] %v1350
        %1361 = vst [vmem:[%s209 + $0x38] sm:$0xff] %v1352
        %s1362 = sand.u32 %s117, 1
        %s1363 = scalar_lea.sflag [#allocation3], %s1362
        %s1364 = sand.u32 %s117, 1
        %s1365 = smul.addr %s1364, 64
        %s1366 = scalar_lea.vmem [#allocation2], %s1365
        // Predicated region
        $region33: #{linear_pallas.1} parent=31 // pred_check
          %p1367 = pneg %p127
        $region34: #{linear_pallas.1} parent=31 // pred_check_branch
          %1369 = sbr.rel (%p1367) target = $region36
        $region35: #{linear_pallas.1} parent=31 // pred_region
          %s1370 = smul.u32 8, %s22
          %s1372 = ssub.s32 1024, 1024
          %1373 = vsyncadd %s1363, %s1372
          %s1374 = smul.addr %s21, 16
          %s1375 = sadd.s32 %s1370, %s1374
          %s1376 = smul.addr %s1375, 128
          %s1377 = scalar_lea.hbm %s3, %s1376
          %s1379 = sshll.u32 %s1366, 4
          %s1380 = int_to_ptr.vmem [resolvable:$true] %s1379
          %1382 = dma.vmem_to_hbm [thread:$0]  %s1380, 1024, %s1377, %s1363
        $region36: #{linear_pallas.1} parent=31 // pred_fallthru
          _
      $region32: #{linear_pallas.1} parent=5 // pred_fallthru
        _
      %p1383 = scmp.le.s32.totalorder 2, %s12
      // Predicated region
      $region37: #{linear_pallas.1} parent=5 // pred_check
        %p1384 = pneg %p1383
      $region38: #{linear_pallas.1} parent=5 // pred_check_branch
        %1386 = sbr.rel (%p1384) target = $region40
      $region39: #{linear_pallas.1} parent=5 // pred_region
        %s1387 = ssub.s32 %s12, 2
        // Predicated region
        $region41: #{linear_pallas.1} parent=39 // pred_check
          %p1388 = pneg %p133
        $region42: #{linear_pallas.1} parent=39 // pred_check_branch
          %1390 = sbr.rel (%p1388) target = $region44
        $region43: #{linear_pallas.1} parent=39 // pred_region
          %s1391 = sand.u32 %s118, 1
          %s1392 = scalar_lea.sflag [#allocation3], %s1391
          %s1393 = sand.u32 %s118, 1
          %s1394 = smul.addr %s1393, 64
          %s1395 = scalar_lea.vmem [#allocation2], %s1394
          %1396 = dma.done %s1392, 1024
        $region44: #{linear_pallas.1} parent=39 // pred_fallthru
          _
      $region40: #{linear_pallas.1} parent=5 // pred_fallthru
        _
    $region6: #{linear_pallas.1} parent=1 // loop_footer
      %s16 = sadd.s32 1, %s12
    $region7: #{linear_pallas.1} parent=1 // loop_footer_branch
      %11 = sbr.rel target = $region3
    $region8: #{linear_pallas.1} parent=1 // loop_exit
      _
    %1397 = vsyncpa [#allocation3], 1
    %s1398 = scalar_lea.sflag [#allocation3], 1
    %1399 = vsyncpa %s1398, 1

</llo_original>
